<compile_context>
chip_gen: v7x
topology: tpu7x:2x2x1
jax: 0.10.0
libtpu: 0.0.40
codegen_flags: <defaults>
</compile_context>

<pallas_src>
import jax
import jax.numpy as jnp
from jax import lax
from jax.experimental import pallas as pl
from jax.experimental.pallas import tpu as pltpu


def _make_basic_block_kernel(H, W):
    """Build the fused BasicBlock kernel for a fixed HxW spatial size."""
    HW = H * W
    PAD = W + 1                      # halo on each side of the flat image
    L = HW + 2 * PAD                 # flat scratch length incl. halo

    def kernel(x_ref, w1_ref, w2_ref, s1_ref, b1_ref, s2_ref, b2_ref,
               out_ref, buf):
        # Per-lane column index of each flattened spatial position.
        col = lax.broadcasted_iota(jnp.int32, (1, HW), 1) % W
        # dx=0 taps would wrap to the previous row at col == 0; dx=2 taps would
        # wrap to the next row at col == W-1.  Zero those lanes of the patch.
        mask_l = (col != 0).astype(jnp.float32)
        mask_r = (col != W - 1).astype(jnp.float32)

        def conv3x3(w_ref):
            """3x3 'SAME' conv from the zero-halo'd flat scratch buffer.

            buf:   (C, L) f32, image stored at lane offset PAD, zeros in halos.
            w_ref: (3, 3, Cout, Cin).
            Returns (Cout, H*W) f32 accumulator.
            """
            cout = w_ref.shape[2]
            acc = jnp.zeros((cout, HW), jnp.float32)
            for dy in range(3):
                for dx in range(3):
                    # Contiguous window == shift by (dy-1)*W + (dx-1); the row
                    # halo is supplied by the zero padding of the buffer.
                    patch = buf[:, pl.ds(dy * W + dx, HW)]
                    if dx == 0:
                        patch = patch * mask_l
                    elif dx == 2:
                        patch = patch * mask_r
                    acc = acc + jnp.dot(w_ref[dy, dx], patch,
                                        preferred_element_type=jnp.float32)
            return acc

        # Zero only the two halo regions; the interior is fully overwritten.
        zeros_halo = jnp.zeros((buf.shape[0], PAD), jnp.float32)
        buf[:, pl.ds(0, PAD)] = zeros_halo
        buf[:, pl.ds(PAD + HW, PAD)] = zeros_halo

        # ---- conv1 + bn1 + relu ------------------------------------------
        buf[:, pl.ds(PAD, HW)] = x_ref[0].astype(jnp.float32)
        y1 = conv3x3(w1_ref)                                  # (C, H*W) f32
        y1 = jnp.maximum(y1 * s1_ref[...] + b1_ref[...], 0.0)

        # ---- conv2 + bn2 + residual + relu -------------------------------
        buf[:, pl.ds(PAD, HW)] = y1          # reuse scratch; halos still zero
        y2 = conv3x3(w2_ref)
        y2 = y2 * s2_ref[...] + b2_ref[...] + x_ref[0].astype(jnp.float32)
        out_ref[0] = jnp.maximum(y2, 0.0).astype(out_ref.dtype)

    return kernel, L


def basic_block_forward(x_nchw, params):
    """Fused BasicBlock forward (stride=1, downsample=None).

    x_nchw: (N, C, H, W) float32 (PyTorch layout).
    params: (w1, s1, b1, w2, s2, b2) with w*: (3, 3, Cin, Cout) HWIO and
            s*/b*: (C,) folded BatchNorm scale/bias (eval-mode running stats).
    """
    w1, s1, b1, w2, s2, b2 = params
    N, C, H, W = x_nchw.shape
    assert w1.shape == (3, 3, C, C) and w2.shape == (3, 3, C, C), \
        "identity residual requires inplanes == planes"
    HW = H * W

    xf = x_nchw.reshape(N, C, HW)            # free reshape (row-major NCHW)
    # (3,3,Cin,Cout) -> (3,3,Cout,Cin) so each tap is a (Cout,Cin)@(Cin,HW) dot.
    w1t = jnp.transpose(w1, (0, 1, 3, 2)).astype(jnp.float32)
    w2t = jnp.transpose(w2, (0, 1, 3, 2)).astype(jnp.float32)
    s1c = s1.reshape(C, 1).astype(jnp.float32)
    b1c = b1.reshape(C, 1).astype(jnp.float32)
    s2c = s2.reshape(C, 1).astype(jnp.float32)
    b2c = b2.reshape(C, 1).astype(jnp.float32)

    kernel, L = _make_basic_block_kernel(H, W)

    out = pl.pallas_call(
        kernel,
        out_shape=jax.ShapeDtypeStruct((N, C, HW), x_nchw.dtype),
        grid=(N,),
        in_specs=[
            pl.BlockSpec((1, C, HW), lambda n: (n, 0, 0)),       # x (flat)
            pl.BlockSpec((3, 3, C, C), lambda n: (0, 0, 0, 0)),  # w1 (OI)
            pl.BlockSpec((3, 3, C, C), lambda n: (0, 0, 0, 0)),  # w2 (OI)
            pl.BlockSpec((C, 1), lambda n: (0, 0)),              # bn1 scale
            pl.BlockSpec((C, 1), lambda n: (0, 0)),              # bn1 bias
            pl.BlockSpec((C, 1), lambda n: (0, 0)),              # bn2 scale
            pl.BlockSpec((C, 1), lambda n: (0, 0)),              # bn2 bias
        ],
        out_specs=pl.BlockSpec((1, C, HW), lambda n: (n, 0, 0)),
        scratch_shapes=[
            pltpu.VMEM((C, L), jnp.float32),   # shared zero-halo'd flat buffer
        ],
        compiler_params=pltpu.CompilerParams(
            dimension_semantics=("parallel",),
            vmem_limit_bytes=32 * 1024 * 1024),
    )(xf, w1t, w2t, s1c, b1c, s2c, b2c)

    return out.reshape(N, C, H, W)


def _fold_bn(gamma, beta, mean, var, eps=1e-5):
    scale = gamma / jnp.sqrt(var + eps)
    bias = beta - mean * scale
    return scale, bias


def _reference(x, w1, s1, b1, w2, s2, b2):
    """Plain-JAX reference (NCHW activations, HWIO weights)."""
    dn = ("NCHW", "HWIO", "NCHW")

    def bnc(v):
        return v.reshape(1, -1, 1, 1)

    y = lax.conv_general_dilated(x, w1, (1, 1), "SAME", dimension_numbers=dn)
    y = jnp.maximum(y * bnc(s1) + bnc(b1), 0.0)
    z = lax.conv_general_dilated(y, w2, (1, 1), "SAME", dimension_numbers=dn)
    z = jnp.maximum(z * bnc(s2) + bnc(b2) + x, 0.0)
    return z


if __name__ == "__main__":
    key = jax.random.PRNGKey(0)
    N, C, H, W = 2, 4, 16, 16          # inplanes = planes = 4, stride = 1
    ks = jax.random.split(key, 11)

    # PyTorch-style NCHW input (kernel consumes NCHW directly).
    x = jax.random.normal(ks[0], (N, C, H, W), jnp.float32)

    # conv weights (kh, kw, Cin, Cout), no bias (conv3x3 uses bias=False).
    w1 = jax.random.normal(ks[1], (3, 3, C, C), jnp.float32) * 0.1
    w2 = jax.random.normal(ks[2], (3, 3, C, C), jnp.float32) * 0.1

    # BatchNorm2d parameters (eval-mode running stats, folded to affine).
    g1 = 1.0 + 0.1 * jax.random.normal(ks[3], (C,), jnp.float32)
    be1 = 0.1 * jax.random.normal(ks[4], (C,), jnp.float32)
    m1 = 0.1 * jax.random.normal(ks[5], (C,), jnp.float32)
    v1 = jax.random.uniform(ks[6], (C,), jnp.float32, 0.5, 1.5)
    g2 = 1.0 + 0.1 * jax.random.normal(ks[7], (C,), jnp.float32)
    be2 = 0.1 * jax.random.normal(ks[8], (C,), jnp.float32)
    m2 = 0.1 * jax.random.normal(ks[9], (C,), jnp.float32)
    v2 = jax.random.uniform(ks[10], (C,), jnp.float32, 0.5, 1.5)

    s1, b1 = _fold_bn(g1, be1, m1, v1)
    s2, b2 = _fold_bn(g2, be2, m2, v2)

    params = (w1, s1, b1, w2, s2, b2)
    out = basic_block_forward(x, params)
    out = jax.block_until_ready(out)

    ref = _reference(x, w1, s1, b1, w2, s2, b2)
    assert out.shape == (N, C, H, W)
    err = float(jnp.max(jnp.abs(out - ref)))
    assert err < 1e-4, f"mismatch vs reference conv: max abs err = {err}"

    print("KERNEL_OK")
</pallas_src>

<mosaic_0001>
module attributes {stable_mosaic.version = 11 : i64} {
  func.func @kernel(%arg0: i32, %arg1: memref<1x4x256xf32, #tpu.memory_space<vmem>>, %arg2: memref<3x3x4x4xf32, #tpu.memory_space<vmem>>, %arg3: memref<3x3x4x4xf32, #tpu.memory_space<vmem>>, %arg4: memref<4x1xf32, #tpu.memory_space<vmem>>, %arg5: memref<4x1xf32, #tpu.memory_space<vmem>>, %arg6: memref<4x1xf32, #tpu.memory_space<vmem>>, %arg7: memref<4x1xf32, #tpu.memory_space<vmem>>, %arg8: memref<1x4x256xf32, #tpu.memory_space<vmem>>, %arg9: memref<4x290xf32, #tpu.memory_space<vmem>>) attributes {dimension_semantics = [#tpu.dimension_semantics<parallel>], iteration_bounds = array<i64: 2>, scalar_prefetch = 0 : i64, scratch_operands = 1 : i64, tpu.core_type = #tpu.core_type<tc>, window_params = [{transform_indices = @transform_0, window_bounds = array<i64: 1, 4, 256>}, {pipeline_mode = #tpu.pipeline_mode<synchronous>, transform_indices = @transform_1, window_bounds = array<i64: 3, 3, 4, 4>}, {pipeline_mode = #tpu.pipeline_mode<synchronous>, transform_indices = @transform_2, window_bounds = array<i64: 3, 3, 4, 4>}, {pipeline_mode = #tpu.pipeline_mode<synchronous>, transform_indices = @transform_3, window_bounds = array<i64: 4, 1>}, {pipeline_mode = #tpu.pipeline_mode<synchronous>, transform_indices = @transform_4, window_bounds = array<i64: 4, 1>}, {pipeline_mode = #tpu.pipeline_mode<synchronous>, transform_indices = @transform_5, window_bounds = array<i64: 4, 1>}, {pipeline_mode = #tpu.pipeline_mode<synchronous>, transform_indices = @transform_6, window_bounds = array<i64: 4, 1>}, {transform_indices = @transform_7, window_bounds = array<i64: 1, 4, 256>}]} {
    %0 = tpu.iota {dimensions = array<i32: 1>} : vector<1x256xi32>
    %c16_i32 = arith.constant 16 : i32
    %c0_i32 = arith.constant 0 : i32
    %1 = arith.cmpi eq, %c16_i32, %c0_i32 : i32
    %c1_i32 = arith.constant 1 : i32
    %2 = arith.select %1, %c1_i32, %c16_i32 : i32
    %3 = vector.broadcast %2 : i32 to vector<1x256xi32>
    %4 = arith.remsi %0, %3 : vector<1x256xi32>
    %c0_i32_0 = arith.constant 0 : i32
    %5 = vector.broadcast %c0_i32_0 : i32 to vector<1x256xi32>
    %6 = arith.cmpi ne, %4, %5 : vector<1x256xi32>
    %c0_i32_1 = arith.constant 0 : i32
    %7 = vector.broadcast %c0_i32_1 : i32 to vector<1x256xi32>
    %8 = arith.cmpi slt, %4, %7 : vector<1x256xi32>
    %c0_i32_2 = arith.constant 0 : i32
    %9 = arith.cmpi slt, %2, %c0_i32_2 : i32
    %10 = vector.broadcast %9 : i1 to vector<1x256xi1>
    %11 = vector.broadcast %10 : vector<1x256xi1> to vector<1x256xi1>
    %12 = arith.xori %8, %11 : vector<1x256xi1>
    %13 = arith.andi %12, %6 : vector<1x256xi1>
    %14 = vector.broadcast %2 : i32 to vector<1x256xi32>
    %15 = arith.addi %4, %14 : vector<1x256xi32>
    %16 = arith.select %13, %15, %4 : vector<1x256xi1>, vector<1x256xi32>
    %c0_i32_3 = arith.constant 0 : i32
    %17 = vector.broadcast %c0_i32_3 : i32 to vector<1x256xi32>
    %18 = arith.cmpi ne, %16, %17 : vector<1x256xi32>
    %19 = arith.extui %18 : vector<1x256xi1> to vector<1x256xi32>
    %20 = arith.sitofp %19 : vector<1x256xi32> to vector<1x256xf32>
    %c15_i32 = arith.constant 15 : i32
    %21 = vector.broadcast %c15_i32 : i32 to vector<1x256xi32>
    %22 = arith.cmpi ne, %16, %21 : vector<1x256xi32>
    %23 = arith.extui %22 : vector<1x256xi1> to vector<1x256xi32>
    %24 = arith.sitofp %23 : vector<1x256xi32> to vector<1x256xf32>
    %cst = arith.constant 0.000000e+00 : f32
    %25 = vector.broadcast %cst : f32 to vector<4x17xf32>
    %c0 = arith.constant 0 : index
    %c0_4 = arith.constant 0 : index
    %26 = vector.load %arg9[%c0, %c0_4] : memref<4x290xf32, #tpu.memory_space<vmem>>, vector<4x17xf32>
    tpu.vector_store %arg9[%c0, %c0_4], %25 {strides = array<i32>} : memref<4x290xf32, #tpu.memory_space<vmem>>, vector<4x17xf32>,
    %c0_5 = arith.constant 0 : index
    %c273 = arith.constant 273 : index
    %27 = vector.load %arg9[%c0_5, %c273] : memref<4x290xf32, #tpu.memory_space<vmem>>, vector<4x17xf32>
    tpu.vector_store %arg9[%c0_5, %c273], %25 {strides = array<i32>} : memref<4x290xf32, #tpu.memory_space<vmem>>, vector<4x17xf32>,
    %c0_6 = arith.constant 0 : index
    %c0_7 = arith.constant 0 : index
    %c0_8 = arith.constant 0 : index
    %28 = vector.load %arg1[%c0_6, %c0_7, %c0_8] : memref<1x4x256xf32, #tpu.memory_space<vmem>>, vector<1x4x256xf32>
    %29 = vector.shape_cast %28 : vector<1x4x256xf32> to vector<4x256xf32>
    %c0_9 = arith.constant 0 : index
    %c17 = arith.constant 17 : index
    %30 = vector.load %arg9[%c0_9, %c17] : memref<4x290xf32, #tpu.memory_space<vmem>>, vector<4x256xf32>
    tpu.vector_store %arg9[%c0_9, %c17], %29 {strides = array<i32>} : memref<4x290xf32, #tpu.memory_space<vmem>>, vector<4x256xf32>,
    %cst_10 = arith.constant 0.000000e+00 : f32
    %31 = vector.broadcast %cst_10 : f32 to vector<4x256xf32>
    %c0_11 = arith.constant 0 : index
    %c0_12 = arith.constant 0 : index
    %32 = vector.load %arg9[%c0_11, %c0_12] : memref<4x290xf32, #tpu.memory_space<vmem>>, vector<4x256xf32>
    %33 = vector.broadcast %20 : vector<1x256xf32> to vector<4x256xf32>
    %34 = arith.mulf %32, %33 : vector<4x256xf32>
    %c0_13 = arith.constant 0 : index
    %c0_14 = arith.constant 0 : index
    %c0_15 = arith.constant 0 : index
    %c0_16 = arith.constant 0 : index
    %35 = vector.load %arg2[%c0_13, %c0_14, %c0_15, %c0_16] : memref<3x3x4x4xf32, #tpu.memory_space<vmem>>, vector<1x1x4x4xf32>
    %36 = vector.shape_cast %35 : vector<1x1x4x4xf32> to vector<4x4xf32>
    %cst_17 = arith.constant dense<0.000000e+00> : vector<4x256xf32>
    %37 = tpu.matmul %36, %34, %cst_17 {dimension_numbers = #tpu.dot_dimension_numbers<[1], [0], [0], [1], [0, 0, 1, 1], [], []>} : vector<4x4xf32>, vector<4x256xf32>, vector<4x256xf32> -> vector<4x256xf32>
    %38 = arith.addf %31, %37 : vector<4x256xf32>
    %c0_18 = arith.constant 0 : index
    %c1 = arith.constant 1 : index
    %39 = vector.load %arg9[%c0_18, %c1] : memref<4x290xf32, #tpu.memory_space<vmem>>, vector<4x256xf32>
    %c0_19 = arith.constant 0 : index
    %c1_20 = arith.constant 1 : index
    %c0_21 = arith.constant 0 : index
    %c0_22 = arith.constant 0 : index
    %40 = vector.load %arg2[%c0_19, %c1_20, %c0_21, %c0_22] : memref<3x3x4x4xf32, #tpu.memory_space<vmem>>, vector<1x1x4x4xf32>
    %41 = vector.shape_cast %40 : vector<1x1x4x4xf32> to vector<4x4xf32>
    %cst_23 = arith.constant dense<0.000000e+00> : vector<4x256xf32>
    %42 = tpu.matmul %41, %39, %cst_23 {dimension_numbers = #tpu.dot_dimension_numbers<[1], [0], [0], [1], [0, 0, 1, 1], [], []>} : vector<4x4xf32>, vector<4x256xf32>, vector<4x256xf32> -> vector<4x256xf32>
    %43 = arith.addf %38, %42 : vector<4x256xf32>
    %c0_24 = arith.constant 0 : index
    %c2 = arith.constant 2 : index
    %44 = vector.load %arg9[%c0_24, %c2] : memref<4x290xf32, #tpu.memory_space<vmem>>, vector<4x256xf32>
    %45 = vector.broadcast %24 : vector<1x256xf32> to vector<4x256xf32>
    %46 = arith.mulf %44, %45 : vector<4x256xf32>
    %c0_25 = arith.constant 0 : index
    %c2_26 = arith.constant 2 : index
    %c0_27 = arith.constant 0 : index
    %c0_28 = arith.constant 0 : index
    %47 = vector.load %arg2[%c0_25, %c2_26, %c0_27, %c0_28] : memref<3x3x4x4xf32, #tpu.memory_space<vmem>>, vector<1x1x4x4xf32>
    %48 = vector.shape_cast %47 : vector<1x1x4x4xf32> to vector<4x4xf32>
    %cst_29 = arith.constant dense<0.000000e+00> : vector<4x256xf32>
    %49 = tpu.matmul %48, %46, %cst_29 {dimension_numbers = #tpu.dot_dimension_numbers<[1], [0], [0], [1], [0, 0, 1, 1], [], []>} : vector<4x4xf32>, vector<4x256xf32>, vector<4x256xf32> -> vector<4x256xf32>
    %50 = arith.addf %43, %49 : vector<4x256xf32>
    %c0_30 = arith.constant 0 : index
    %c16 = arith.constant 16 : index
    %51 = vector.load %arg9[%c0_30, %c16] : memref<4x290xf32, #tpu.memory_space<vmem>>, vector<4x256xf32>
    %52 = vector.broadcast %20 : vector<1x256xf32> to vector<4x256xf32>
    %53 = arith.mulf %51, %52 : vector<4x256xf32>
    %c1_31 = arith.constant 1 : index
    %c0_32 = arith.constant 0 : index
    %c0_33 = arith.constant 0 : index
    %c0_34 = arith.constant 0 : index
    %54 = vector.load %arg2[%c1_31, %c0_32, %c0_33, %c0_34] : memref<3x3x4x4xf32, #tpu.memory_space<vmem>>, vector<1x1x4x4xf32>
    %55 = vector.shape_cast %54 : vector<1x1x4x4xf32> to vector<4x4xf32>
    %cst_35 = arith.constant dense<0.000000e+00> : vector<4x256xf32>
    %56 = tpu.matmul %55, %53, %cst_35 {dimension_numbers = #tpu.dot_dimension_numbers<[1], [0], [0], [1], [0, 0, 1, 1], [], []>} : vector<4x4xf32>, vector<4x256xf32>, vector<4x256xf32> -> vector<4x256xf32>
    %57 = arith.addf %50, %56 : vector<4x256xf32>
    %c0_36 = arith.constant 0 : index
    %c17_37 = arith.constant 17 : index
    %58 = vector.load %arg9[%c0_36, %c17_37] : memref<4x290xf32, #tpu.memory_space<vmem>>, vector<4x256xf32>
    %c1_38 = arith.constant 1 : index
    %c1_39 = arith.constant 1 : index
    %c0_40 = arith.constant 0 : index
    %c0_41 = arith.constant 0 : index
    %59 = vector.load %arg2[%c1_38, %c1_39, %c0_40, %c0_41] : memref<3x3x4x4xf32, #tpu.memory_space<vmem>>, vector<1x1x4x4xf32>
    %60 = vector.shape_cast %59 : vector<1x1x4x4xf32> to vector<4x4xf32>
    %cst_42 = arith.constant dense<0.000000e+00> : vector<4x256xf32>
    %61 = tpu.matmul %60, %58, %cst_42 {dimension_numbers = #tpu.dot_dimension_numbers<[1], [0], [0], [1], [0, 0, 1, 1], [], []>} : vector<4x4xf32>, vector<4x256xf32>, vector<4x256xf32> -> vector<4x256xf32>
    %62 = arith.addf %57, %61 : vector<4x256xf32>
    %c0_43 = arith.constant 0 : index
    %c18 = arith.constant 18 : index
    %63 = vector.load %arg9[%c0_43, %c18] : memref<4x290xf32, #tpu.memory_space<vmem>>, vector<4x256xf32>
    %64 = vector.broadcast %24 : vector<1x256xf32> to vector<4x256xf32>
    %65 = arith.mulf %63, %64 : vector<4x256xf32>
    %c1_44 = arith.constant 1 : index
    %c2_45 = arith.constant 2 : index
    %c0_46 = arith.constant 0 : index
    %c0_47 = arith.constant 0 : index
    %66 = vector.load %arg2[%c1_44, %c2_45, %c0_46, %c0_47] : memref<3x3x4x4xf32, #tpu.memory_space<vmem>>, vector<1x1x4x4xf32>
    %67 = vector.shape_cast %66 : vector<1x1x4x4xf32> to vector<4x4xf32>
    %cst_48 = arith.constant dense<0.000000e+00> : vector<4x256xf32>
    %68 = tpu.matmul %67, %65, %cst_48 {dimension_numbers = #tpu.dot_dimension_numbers<[1], [0], [0], [1], [0, 0, 1, 1], [], []>} : vector<4x4xf32>, vector<4x256xf32>, vector<4x256xf32> -> vector<4x256xf32>
    %69 = arith.addf %62, %68 : vector<4x256xf32>
    %c0_49 = arith.constant 0 : index
    %c32 = arith.constant 32 : index
    %70 = vector.load %arg9[%c0_49, %c32] : memref<4x290xf32, #tpu.memory_space<vmem>>, vector<4x256xf32>
    %71 = vector.broadcast %20 : vector<1x256xf32> to vector<4x256xf32>
    %72 = arith.mulf %70, %71 : vector<4x256xf32>
    %c2_50 = arith.constant 2 : index
    %c0_51 = arith.constant 0 : index
    %c0_52 = arith.constant 0 : index
    %c0_53 = arith.constant 0 : index
    %73 = vector.load %arg2[%c2_50, %c0_51, %c0_52, %c0_53] : memref<3x3x4x4xf32, #tpu.memory_space<vmem>>, vector<1x1x4x4xf32>
    %74 = vector.shape_cast %73 : vector<1x1x4x4xf32> to vector<4x4xf32>
    %cst_54 = arith.constant dense<0.000000e+00> : vector<4x256xf32>
    %75 = tpu.matmul %74, %72, %cst_54 {dimension_numbers = #tpu.dot_dimension_numbers<[1], [0], [0], [1], [0, 0, 1, 1], [], []>} : vector<4x4xf32>, vector<4x256xf32>, vector<4x256xf32> -> vector<4x256xf32>
    %76 = arith.addf %69, %75 : vector<4x256xf32>
    %c0_55 = arith.constant 0 : index
    %c33 = arith.constant 33 : index
    %77 = vector.load %arg9[%c0_55, %c33] : memref<4x290xf32, #tpu.memory_space<vmem>>, vector<4x256xf32>
    %c2_56 = arith.constant 2 : index
    %c1_57 = arith.constant 1 : index
    %c0_58 = arith.constant 0 : index
    %c0_59 = arith.constant 0 : index
    %78 = vector.load %arg2[%c2_56, %c1_57, %c0_58, %c0_59] : memref<3x3x4x4xf32, #tpu.memory_space<vmem>>, vector<1x1x4x4xf32>
    %79 = vector.shape_cast %78 : vector<1x1x4x4xf32> to vector<4x4xf32>
    %cst_60 = arith.constant dense<0.000000e+00> : vector<4x256xf32>
    %80 = tpu.matmul %79, %77, %cst_60 {dimension_numbers = #tpu.dot_dimension_numbers<[1], [0], [0], [1], [0, 0, 1, 1], [], []>} : vector<4x4xf32>, vector<4x256xf32>, vector<4x256xf32> -> vector<4x256xf32>
    %81 = arith.addf %76, %80 : vector<4x256xf32>
    %c0_61 = arith.constant 0 : index
    %c34 = arith.constant 34 : index
    %82 = vector.load %arg9[%c0_61, %c34] : memref<4x290xf32, #tpu.memory_space<vmem>>, vector<4x256xf32>
    %83 = vector.broadcast %24 : vector<1x256xf32> to vector<4x256xf32>
    %84 = arith.mulf %82, %83 : vector<4x256xf32>
    %c2_62 = arith.constant 2 : index
    %c2_63 = arith.constant 2 : index
    %c0_64 = arith.constant 0 : index
    %c0_65 = arith.constant 0 : index
    %85 = vector.load %arg2[%c2_62, %c2_63, %c0_64, %c0_65] : memref<3x3x4x4xf32, #tpu.memory_space<vmem>>, vector<1x1x4x4xf32>
    %86 = vector.shape_cast %85 : vector<1x1x4x4xf32> to vector<4x4xf32>
    %cst_66 = arith.constant dense<0.000000e+00> : vector<4x256xf32>
    %87 = tpu.matmul %86, %84, %cst_66 {dimension_numbers = #tpu.dot_dimension_numbers<[1], [0], [0], [1], [0, 0, 1, 1], [], []>} : vector<4x4xf32>, vector<4x256xf32>, vector<4x256xf32> -> vector<4x256xf32>
    %88 = arith.addf %81, %87 : vector<4x256xf32>
    %c0_67 = arith.constant 0 : index
    %c0_68 = arith.constant 0 : index
    %89 = vector.load %arg4[%c0_67, %c0_68] : memref<4x1xf32, #tpu.memory_space<vmem>>, vector<4x1xf32>
    %90 = vector.broadcast %89 : vector<4x1xf32> to vector<4x256xf32>
    %91 = arith.mulf %88, %90 : vector<4x256xf32>
    %c0_69 = arith.constant 0 : index
    %c0_70 = arith.constant 0 : index
    %92 = vector.load %arg5[%c0_69, %c0_70] : memref<4x1xf32, #tpu.memory_space<vmem>>, vector<4x1xf32>
    %93 = vector.broadcast %92 : vector<4x1xf32> to vector<4x256xf32>
    %94 = arith.addf %91, %93 : vector<4x256xf32>
    %cst_71 = arith.constant 0.000000e+00 : f32
    %95 = vector.broadcast %cst_71 : f32 to vector<4x256xf32>
    %96 = arith.maximumf %94, %95 : vector<4x256xf32>
    %c0_72 = arith.constant 0 : index
    %c17_73 = arith.constant 17 : index
    %97 = vector.load %arg9[%c0_72, %c17_73] : memref<4x290xf32, #tpu.memory_space<vmem>>, vector<4x256xf32>
    tpu.vector_store %arg9[%c0_72, %c17_73], %96 {strides = array<i32>} : memref<4x290xf32, #tpu.memory_space<vmem>>, vector<4x256xf32>,
    %cst_74 = arith.constant 0.000000e+00 : f32
    %98 = vector.broadcast %cst_74 : f32 to vector<4x256xf32>
    %c0_75 = arith.constant 0 : index
    %c0_76 = arith.constant 0 : index
    %99 = vector.load %arg9[%c0_75, %c0_76] : memref<4x290xf32, #tpu.memory_space<vmem>>, vector<4x256xf32>
    %100 = vector.broadcast %20 : vector<1x256xf32> to vector<4x256xf32>
    %101 = arith.mulf %99, %100 : vector<4x256xf32>
    %c0_77 = arith.constant 0 : index
    %c0_78 = arith.constant 0 : index
    %c0_79 = arith.constant 0 : index
    %c0_80 = arith.constant 0 : index
    %102 = vector.load %arg3[%c0_77, %c0_78, %c0_79, %c0_80] : memref<3x3x4x4xf32, #tpu.memory_space<vmem>>, vector<1x1x4x4xf32>
    %103 = vector.shape_cast %102 : vector<1x1x4x4xf32> to vector<4x4xf32>
    %cst_81 = arith.constant dense<0.000000e+00> : vector<4x256xf32>
    %104 = tpu.matmul %103, %101, %cst_81 {dimension_numbers = #tpu.dot_dimension_numbers<[1], [0], [0], [1], [0, 0, 1, 1], [], []>} : vector<4x4xf32>, vector<4x256xf32>, vector<4x256xf32> -> vector<4x256xf32>
    %105 = arith.addf %98, %104 : vector<4x256xf32>
    %c0_82 = arith.constant 0 : index
    %c1_83 = arith.constant 1 : index
    %106 = vector.load %arg9[%c0_82, %c1_83] : memref<4x290xf32, #tpu.memory_space<vmem>>, vector<4x256xf32>
    %c0_84 = arith.constant 0 : index
    %c1_85 = arith.constant 1 : index
    %c0_86 = arith.constant 0 : index
    %c0_87 = arith.constant 0 : index
    %107 = vector.load %arg3[%c0_84, %c1_85, %c0_86, %c0_87] : memref<3x3x4x4xf32, #tpu.memory_space<vmem>>, vector<1x1x4x4xf32>
    %108 = vector.shape_cast %107 : vector<1x1x4x4xf32> to vector<4x4xf32>
    %cst_88 = arith.constant dense<0.000000e+00> : vector<4x256xf32>
    %109 = tpu.matmul %108, %106, %cst_88 {dimension_numbers = #tpu.dot_dimension_numbers<[1], [0], [0], [1], [0, 0, 1, 1], [], []>} : vector<4x4xf32>, vector<4x256xf32>, vector<4x256xf32> -> vector<4x256xf32>
    %110 = arith.addf %105, %109 : vector<4x256xf32>
    %c0_89 = arith.constant 0 : index
    %c2_90 = arith.constant 2 : index
    %111 = vector.load %arg9[%c0_89, %c2_90] : memref<4x290xf32, #tpu.memory_space<vmem>>, vector<4x256xf32>
    %112 = vector.broadcast %24 : vector<1x256xf32> to vector<4x256xf32>
    %113 = arith.mulf %111, %112 : vector<4x256xf32>
    %c0_91 = arith.constant 0 : index
    %c2_92 = arith.constant 2 : index
    %c0_93 = arith.constant 0 : index
    %c0_94 = arith.constant 0 : index
    %114 = vector.load %arg3[%c0_91, %c2_92, %c0_93, %c0_94] : memref<3x3x4x4xf32, #tpu.memory_space<vmem>>, vector<1x1x4x4xf32>
    %115 = vector.shape_cast %114 : vector<1x1x4x4xf32> to vector<4x4xf32>
    %cst_95 = arith.constant dense<0.000000e+00> : vector<4x256xf32>
    %116 = tpu.matmul %115, %113, %cst_95 {dimension_numbers = #tpu.dot_dimension_numbers<[1], [0], [0], [1], [0, 0, 1, 1], [], []>} : vector<4x4xf32>, vector<4x256xf32>, vector<4x256xf32> -> vector<4x256xf32>
    %117 = arith.addf %110, %116 : vector<4x256xf32>
    %c0_96 = arith.constant 0 : index
    %c16_97 = arith.constant 16 : index
    %118 = vector.load %arg9[%c0_96, %c16_97] : memref<4x290xf32, #tpu.memory_space<vmem>>, vector<4x256xf32>
    %119 = vector.broadcast %20 : vector<1x256xf32> to vector<4x256xf32>
    %120 = arith.mulf %118, %119 : vector<4x256xf32>
    %c1_98 = arith.constant 1 : index
    %c0_99 = arith.constant 0 : index
    %c0_100 = arith.constant 0 : index
    %c0_101 = arith.constant 0 : index
    %121 = vector.load %arg3[%c1_98, %c0_99, %c0_100, %c0_101] : memref<3x3x4x4xf32, #tpu.memory_space<vmem>>, vector<1x1x4x4xf32>
    %122 = vector.shape_cast %121 : vector<1x1x4x4xf32> to vector<4x4xf32>
    %cst_102 = arith.constant dense<0.000000e+00> : vector<4x256xf32>
    %123 = tpu.matmul %122, %120, %cst_102 {dimension_numbers = #tpu.dot_dimension_numbers<[1], [0], [0], [1], [0, 0, 1, 1], [], []>} : vector<4x4xf32>, vector<4x256xf32>, vector<4x256xf32> -> vector<4x256xf32>
    %124 = arith.addf %117, %123 : vector<4x256xf32>
    %c0_103 = arith.constant 0 : index
    %c17_104 = arith.constant 17 : index
    %125 = vector.load %arg9[%c0_103, %c17_104] : memref<4x290xf32, #tpu.memory_space<vmem>>, vector<4x256xf32>
    %c1_105 = arith.constant 1 : index
    %c1_106 = arith.constant 1 : index
    %c0_107 = arith.constant 0 : index
    %c0_108 = arith.constant 0 : index
    %126 = vector.load %arg3[%c1_105, %c1_106, %c0_107, %c0_108] : memref<3x3x4x4xf32, #tpu.memory_space<vmem>>, vector<1x1x4x4xf32>
    %127 = vector.shape_cast %126 : vector<1x1x4x4xf32> to vector<4x4xf32>
    %cst_109 = arith.constant dense<0.000000e+00> : vector<4x256xf32>
    %128 = tpu.matmul %127, %125, %cst_109 {dimension_numbers = #tpu.dot_dimension_numbers<[1], [0], [0], [1], [0, 0, 1, 1], [], []>} : vector<4x4xf32>, vector<4x256xf32>, vector<4x256xf32> -> vector<4x256xf32>
    %129 = arith.addf %124, %128 : vector<4x256xf32>
    %c0_110 = arith.constant 0 : index
    %c18_111 = arith.constant 18 : index
    %130 = vector.load %arg9[%c0_110, %c18_111] : memref<4x290xf32, #tpu.memory_space<vmem>>, vector<4x256xf32>
    %131 = vector.broadcast %24 : vector<1x256xf32> to vector<4x256xf32>
    %132 = arith.mulf %130, %131 : vector<4x256xf32>
    %c1_112 = arith.constant 1 : index
    %c2_113 = arith.constant 2 : index
    %c0_114 = arith.constant 0 : index
    %c0_115 = arith.constant 0 : index
    %133 = vector.load %arg3[%c1_112, %c2_113, %c0_114, %c0_115] : memref<3x3x4x4xf32, #tpu.memory_space<vmem>>, vector<1x1x4x4xf32>
    %134 = vector.shape_cast %133 : vector<1x1x4x4xf32> to vector<4x4xf32>
    %cst_116 = arith.constant dense<0.000000e+00> : vector<4x256xf32>
    %135 = tpu.matmul %134, %132, %cst_116 {dimension_numbers = #tpu.dot_dimension_numbers<[1], [0], [0], [1], [0, 0, 1, 1], [], []>} : vector<4x4xf32>, vector<4x256xf32>, vector<4x256xf32> -> vector<4x256xf32>
    %136 = arith.addf %129, %135 : vector<4x256xf32>
    %c0_117 = arith.constant 0 : index
    %c32_118 = arith.constant 32 : index
    %137 = vector.load %arg9[%c0_117, %c32_118] : memref<4x290xf32, #tpu.memory_space<vmem>>, vector<4x256xf32>
    %138 = vector.broadcast %20 : vector<1x256xf32> to vector<4x256xf32>
    %139 = arith.mulf %137, %138 : vector<4x256xf32>
    %c2_119 = arith.constant 2 : index
    %c0_120 = arith.constant 0 : index
    %c0_121 = arith.constant 0 : index
    %c0_122 = arith.constant 0 : index
    %140 = vector.load %arg3[%c2_119, %c0_120, %c0_121, %c0_122] : memref<3x3x4x4xf32, #tpu.memory_space<vmem>>, vector<1x1x4x4xf32>
    %141 = vector.shape_cast %140 : vector<1x1x4x4xf32> to vector<4x4xf32>
    %cst_123 = arith.constant dense<0.000000e+00> : vector<4x256xf32>
    %142 = tpu.matmul %141, %139, %cst_123 {dimension_numbers = #tpu.dot_dimension_numbers<[1], [0], [0], [1], [0, 0, 1, 1], [], []>} : vector<4x4xf32>, vector<4x256xf32>, vector<4x256xf32> -> vector<4x256xf32>
    %143 = arith.addf %136, %142 : vector<4x256xf32>
    %c0_124 = arith.constant 0 : index
    %c33_125 = arith.constant 33 : index
    %144 = vector.load %arg9[%c0_124, %c33_125] : memref<4x290xf32, #tpu.memory_space<vmem>>, vector<4x256xf32>
    %c2_126 = arith.constant 2 : index
    %c1_127 = arith.constant 1 : index
    %c0_128 = arith.constant 0 : index
    %c0_129 = arith.constant 0 : index
    %145 = vector.load %arg3[%c2_126, %c1_127, %c0_128, %c0_129] : memref<3x3x4x4xf32, #tpu.memory_space<vmem>>, vector<1x1x4x4xf32>
    %146 = vector.shape_cast %145 : vector<1x1x4x4xf32> to vector<4x4xf32>
    %cst_130 = arith.constant dense<0.000000e+00> : vector<4x256xf32>
    %147 = tpu.matmul %146, %144, %cst_130 {dimension_numbers = #tpu.dot_dimension_numbers<[1], [0], [0], [1], [0, 0, 1, 1], [], []>} : vector<4x4xf32>, vector<4x256xf32>, vector<4x256xf32> -> vector<4x256xf32>
    %148 = arith.addf %143, %147 : vector<4x256xf32>
    %c0_131 = arith.constant 0 : index
    %c34_132 = arith.constant 34 : index
    %149 = vector.load %arg9[%c0_131, %c34_132] : memref<4x290xf32, #tpu.memory_space<vmem>>, vector<4x256xf32>
    %150 = vector.broadcast %24 : vector<1x256xf32> to vector<4x256xf32>
    %151 = arith.mulf %149, %150 : vector<4x256xf32>
    %c2_133 = arith.constant 2 : index
    %c2_134 = arith.constant 2 : index
    %c0_135 = arith.constant 0 : index
    %c0_136 = arith.constant 0 : index
    %152 = vector.load %arg3[%c2_133, %c2_134, %c0_135, %c0_136] : memref<3x3x4x4xf32, #tpu.memory_space<vmem>>, vector<1x1x4x4xf32>
    %153 = vector.shape_cast %152 : vector<1x1x4x4xf32> to vector<4x4xf32>
    %cst_137 = arith.constant dense<0.000000e+00> : vector<4x256xf32>
    %154 = tpu.matmul %153, %151, %cst_137 {dimension_numbers = #tpu.dot_dimension_numbers<[1], [0], [0], [1], [0, 0, 1, 1], [], []>} : vector<4x4xf32>, vector<4x256xf32>, vector<4x256xf32> -> vector<4x256xf32>
    %155 = arith.addf %148, %154 : vector<4x256xf32>
    %c0_138 = arith.constant 0 : index
    %c0_139 = arith.constant 0 : index
    %156 = vector.load %arg6[%c0_138, %c0_139] : memref<4x1xf32, #tpu.memory_space<vmem>>, vector<4x1xf32>
    %157 = vector.broadcast %156 : vector<4x1xf32> to vector<4x256xf32>
    %158 = arith.mulf %155, %157 : vector<4x256xf32>
    %c0_140 = arith.constant 0 : index
    %c0_141 = arith.constant 0 : index
    %159 = vector.load %arg7[%c0_140, %c0_141] : memref<4x1xf32, #tpu.memory_space<vmem>>, vector<4x1xf32>
    %160 = vector.broadcast %159 : vector<4x1xf32> to vector<4x256xf32>
    %161 = arith.addf %158, %160 : vector<4x256xf32>
    %c0_142 = arith.constant 0 : index
    %c0_143 = arith.constant 0 : index
    %c0_144 = arith.constant 0 : index
    %162 = vector.load %arg1[%c0_142, %c0_143, %c0_144] : memref<1x4x256xf32, #tpu.memory_space<vmem>>, vector<1x4x256xf32>
    %163 = vector.shape_cast %162 : vector<1x4x256xf32> to vector<4x256xf32>
    %164 = arith.addf %161, %163 : vector<4x256xf32>
    %cst_145 = arith.constant 0.000000e+00 : f32
    %165 = vector.broadcast %cst_145 : f32 to vector<4x256xf32>
    %166 = arith.maximumf %164, %165 : vector<4x256xf32>
    %c0_146 = arith.constant 0 : index
    %c0_147 = arith.constant 0 : index
    %c0_148 = arith.constant 0 : index
    %167 = vector.load %arg8[%c0_146, %c0_147, %c0_148] : memref<1x4x256xf32, #tpu.memory_space<vmem>>, vector<1x4x256xf32>
    %168 = vector.shape_cast %167 : vector<1x4x256xf32> to vector<4x256xf32>
    %169 = vector.shape_cast %166 : vector<4x256xf32> to vector<1x4x256xf32>
    tpu.vector_store %arg8[%c0_146, %c0_147, %c0_148], %169 {strides = array<i32>} : memref<1x4x256xf32, #tpu.memory_space<vmem>>, vector<1x4x256xf32>,
    return
  }
  func.func @transform_0(%arg0: i32) -> (i32, i32, i32) {
    %c0_i32 = arith.constant 0 : i32
    %c0_i32_0 = arith.constant 0 : i32
    %c0_i32_1 = arith.constant 0 : i32
    return %arg0, %c0_i32, %c0_i32_0 : i32, i32, i32
  }
  func.func @transform_1(%arg0: i32) -> (i32, i32, i32, i32) {
    %c0_i32 = arith.constant 0 : i32
    %c0_i32_0 = arith.constant 0 : i32
    %c0_i32_1 = arith.constant 0 : i32
    %c0_i32_2 = arith.constant 0 : i32
    %c0_i32_3 = arith.constant 0 : i32
    return %c0_i32, %c0_i32_0, %c0_i32_1, %c0_i32_2 : i32, i32, i32, i32
  }
  func.func @transform_2(%arg0: i32) -> (i32, i32, i32, i32) {
    %c0_i32 = arith.constant 0 : i32
    %c0_i32_0 = arith.constant 0 : i32
    %c0_i32_1 = arith.constant 0 : i32
    %c0_i32_2 = arith.constant 0 : i32
    %c0_i32_3 = arith.constant 0 : i32
    return %c0_i32, %c0_i32_0, %c0_i32_1, %c0_i32_2 : i32, i32, i32, i32
  }
  func.func @transform_3(%arg0: i32) -> (i32, i32) {
    %c0_i32 = arith.constant 0 : i32
    %c0_i32_0 = arith.constant 0 : i32
    %c0_i32_1 = arith.constant 0 : i32
    return %c0_i32, %c0_i32_0 : i32, i32
  }
  func.func @transform_4(%arg0: i32) -> (i32, i32) {
    %c0_i32 = arith.constant 0 : i32
    %c0_i32_0 = arith.constant 0 : i32
    %c0_i32_1 = arith.constant 0 : i32
    return %c0_i32, %c0_i32_0 : i32, i32
  }
  func.func @transform_5(%arg0: i32) -> (i32, i32) {
    %c0_i32 = arith.constant 0 : i32
    %c0_i32_0 = arith.constant 0 : i32
    %c0_i32_1 = arith.constant 0 : i32
    return %c0_i32, %c0_i32_0 : i32, i32
  }
  func.func @transform_6(%arg0: i32) -> (i32, i32) {
    %c0_i32 = arith.constant 0 : i32
    %c0_i32_0 = arith.constant 0 : i32
    %c0_i32_1 = arith.constant 0 : i32
    return %c0_i32, %c0_i32_0 : i32, i32
  }
  func.func @transform_7(%arg0: i32) -> (i32, i32, i32) {
    %c0_i32 = arith.constant 0 : i32
    %c0_i32_0 = arith.constant 0 : i32
    %c0_i32_1 = arith.constant 0 : i32
    return %arg0, %c0_i32, %c0_i32_0 : i32, i32, i32
  }
}

</mosaic_0001>

<llo_original>
// kernel: tpu_custom_call.1
$region0: #{tpu_custom_call.1}
  #allocation0 [shape = 'u32[]', space=smem, size = 0x4, offset = 0x4, fixed_abs, tag = 'smem constant byte address 0x4 - core index']
  #allocation1 [shape = 'u32[144,128]{1,0:T(1,128)}', space=vmem, size = 0x12000, scoped, tag = 'internal scratch']
  #allocation2 [shape = 'f32[4,290]{1,0:T(4,128)}', space=vmem, size = 0x1800, scoped, tag = 'scratch operand']
  %s0 = inlined_call_operand.vmem [shape: f32[2,4,256], index: 0, kind: input, shape index: {}]
  %s1 = inlined_call_operand.hbm [shape: f32[3,3,4,4], index: 1, kind: input, shape index: {}]
  %s2 = inlined_call_operand.hbm [shape: f32[3,3,4,4], index: 2, kind: input, shape index: {}]
  %s3 = inlined_call_operand.vmem [shape: f32[4,1], index: 3, kind: input, shape index: {}]
  %s4 = inlined_call_operand.vmem [shape: f32[4,1], index: 4, kind: input, shape index: {}]
  %s5 = inlined_call_operand.vmem [shape: f32[4,1], index: 5, kind: input, shape index: {}]
  %s6 = inlined_call_operand.vmem [shape: f32[4,1], index: 6, kind: input, shape index: {}]
  %s7 = inlined_call_operand.hbm [shape: f32[2,4,256], index: 7, kind: output, shape index: {}]
  %s8 = sld [smem:[#allocation0]]
  $region69: #{tpu_custom_call.1} parent=0
    _
  %s10 = ssub.s32 1, %s8
  %s11 = scalar_select 0, %s10, %s8
  $region1: #{tpu_custom_call.1} parent=0
    #allocation3 [shape = 'u8[18432]{0}', space=vmem, size = 0x4800, scoped, tag = 'input window, operand 1, single buffered']
    #allocation4 [shape = 's32[2]{0}', space=sflag, size = 0x8, scoped, tag = 'scoped memory for tpu_custom_call.1']
    #allocation5 [shape = 's32[2]{0}', space=sflag, size = 0x8, scoped, tag = 'scoped memory for tpu_custom_call.1']
    #allocation6 [shape = 'u8[18432]{0}', space=vmem, size = 0x4800, scoped, tag = 'input window, operand 2, single buffered']
    #allocation7 [shape = 's32[1]{0}', space=sflag, size = 0x4, scoped, tag = 'scoped memory for tpu_custom_call.1']
    #allocation8 [shape = 'u8[8192]{0}', space=vmem, size = 0x2000, scoped, tag = 'output window, operand 0']
    %12 = vsyncpa [#allocation4], 0
    %13 = vsyncpa [#allocation7], 0
    %14 = vsyncpa [#allocation5], 0
    %s15 = scalar_lea.sflag [#allocation5], 1
    %16 = vsyncpa %s15, 0
    loop: start=0, step=1, limit=4
    $region2: #{tpu_custom_call.1} parent=1 // loop_pre_header
      _
    $region3: #{tpu_custom_call.1} parent=1 // loop_header
      %s18 = sphi 0, %s22
      %p19 = scmp.ge.s32.totalorder %s18, 4
      %s28 = sphi 0, %s30
      %s31 = sphi 0, %s28
      %s32 = sphi 0, %s31
      %s48 = sphi 0, %s32
      %s52 = sphi 0, %s52
      %s54 = sphi 0, %s52
      %s55 = sphi 0, %s54
      %s69 = sphi 0, %s55
      %s73 = sphi 0, %s73
      %s75 = sphi 0, %s73
      %s76 = sphi 0, %s75
      %s90 = sphi 0, %s76
      %s94 = sphi 0, %s94
      %s96 = sphi 0, %s94
      %s97 = sphi 0, %s96
      %s111 = sphi 0, %s97
      %s115 = sphi 0, %s115
      %s117 = sphi 0, %s115
      %s118 = sphi 0, %s117
      %s132 = sphi 0, %s118
      %s136 = sphi 0, %s136
      %s138 = sphi 0, %s136
      %s139 = sphi 0, %s138
      %s153 = sphi 0, %s139
      %s157 = sphi 0, %s157
      %s159 = sphi 0, %s157
      %s160 = sphi 0, %s159
      %s174 = sphi 0, %s160
      %s180 = sphi 0, %s182
      %s183 = sphi 0, %s180
      %s184 = sphi 0, %s183
      %s200 = sphi 0, %s184
    $region4: #{tpu_custom_call.1} parent=1 // loop_header_branch
      %21 = sbr.rel (%p19) target = $region8
    $region5: #{tpu_custom_call.1} parent=1 // loop_body
      %s23 = ssub.s32 %s18, 1
      %s24 = ssub.s32 %s18, 2
      %s25 = sadd.s32 %s18, 1
      %s26 = ssub.s32 %s18, %s25
      %p27 = scmp.eq.s32.totalorder %s26, 0
      %s29 = sadd.s32 %s28, 1
      %s30 = scalar_select %p27, %s28, %s29
      %p33 = pneg %p27
      %p34 = scmp.eq.s32.totalorder %s18, 1
      %p35 = por %p33, %p34
      %p36 = scmp.ne.s32.totalorder %s28, %s31
      %p37 = scmp.eq.s32.totalorder %s18, 0
      %p38 = por %p36, %p37
      %p39 = scmp.ne.s32.totalorder %s28, %s31
      %p40 = scmp.eq.s32.totalorder %s23, 1
      %p41 = por %p39, %p40
      %p42 = scmp.ne.s32.totalorder %s31, %s32
      %p43 = scmp.eq.s32.totalorder %s23, 0
      %p44 = por %p42, %p43
      %p45 = scmp.ne.s32.totalorder %s31, %s32
      %p46 = scmp.eq.s32.totalorder %s24, 1
      %p47 = por %p45, %p46
      %p49 = scmp.ne.s32.totalorder %s32, %s48
      %p50 = scmp.eq.s32.totalorder %s24, 0
      %p51 = por %p49, %p50
      %s53 = sadd.s32 %s52, 1
      %p56 = scmp.eq.s32.totalorder %s18, 1
      %p57 = scmp.ne.s32.totalorder %s52, %s54
      %p58 = scmp.eq.s32.totalorder %s18, 0
      %p59 = por %p57, %p58
      %p60 = scmp.ne.s32.totalorder %s52, %s54
      %p61 = scmp.eq.s32.totalorder %s23, 1
      %p62 = por %p60, %p61
      %p63 = scmp.ne.s32.totalorder %s54, %s55
      %p64 = scmp.eq.s32.totalorder %s23, 0
      %p65 = por %p63, %p64
      %p66 = scmp.ne.s32.totalorder %s54, %s55
      %p67 = scmp.eq.s32.totalorder %s24, 1
      %p68 = por %p66, %p67
      %p70 = scmp.ne.s32.totalorder %s55, %s69
      %p71 = scmp.eq.s32.totalorder %s24, 0
      %p72 = por %p70, %p71
      %s74 = sadd.s32 %s73, 1
      %p77 = scmp.eq.s32.totalorder %s18, 1
      %p78 = scmp.ne.s32.totalorder %s73, %s75
      %p79 = scmp.eq.s32.totalorder %s18, 0
      %p80 = por %p78, %p79
      %p81 = scmp.ne.s32.totalorder %s73, %s75
      %p82 = scmp.eq.s32.totalorder %s23, 1
      %p83 = por %p81, %p82
      %p84 = scmp.ne.s32.totalorder %s75, %s76
      %p85 = scmp.eq.s32.totalorder %s23, 0
      %p86 = por %p84, %p85
      %p87 = scmp.ne.s32.totalorder %s75, %s76
      %p88 = scmp.eq.s32.totalorder %s24, 1
      %p89 = por %p87, %p88
      %p91 = scmp.ne.s32.totalorder %s76, %s90
      %p92 = scmp.eq.s32.totalorder %s24, 0
      %p93 = por %p91, %p92
      %s95 = sadd.s32 %s94, 1
      %p98 = scmp.eq.s32.totalorder %s18, 1
      %p99 = scmp.ne.s32.totalorder %s94, %s96
      %p100 = scmp.eq.s32.totalorder %s18, 0
      %p101 = por %p99, %p100
      %p102 = scmp.ne.s32.totalorder %s94, %s96
      %p103 = scmp.eq.s32.totalorder %s23, 1
      %p104 = por %p102, %p103
      %p105 = scmp.ne.s32.totalorder %s96, %s97
      %p106 = scmp.eq.s32.totalorder %s23, 0
      %p107 = por %p105, %p106
      %p108 = scmp.ne.s32.totalorder %s96, %s97
      %p109 = scmp.eq.s32.totalorder %s24, 1
      %p110 = por %p108, %p109
      %p112 = scmp.ne.s32.totalorder %s97, %s111
      %p113 = scmp.eq.s32.totalorder %s24, 0
      %p114 = por %p112, %p113
      %s116 = sadd.s32 %s115, 1
      %p119 = scmp.eq.s32.totalorder %s18, 1
      %p120 = scmp.ne.s32.totalorder %s115, %s117
      %p121 = scmp.eq.s32.totalorder %s18, 0
      %p122 = por %p120, %p121
      %p123 = scmp.ne.s32.totalorder %s115, %s117
      %p124 = scmp.eq.s32.totalorder %s23, 1
      %p125 = por %p123, %p124
      %p126 = scmp.ne.s32.totalorder %s117, %s118
      %p127 = scmp.eq.s32.totalorder %s23, 0
      %p128 = por %p126, %p127
      %p129 = scmp.ne.s32.totalorder %s117, %s118
      %p130 = scmp.eq.s32.totalorder %s24, 1
      %p131 = por %p129, %p130
      %p133 = scmp.ne.s32.totalorder %s118, %s132
      %p134 = scmp.eq.s32.totalorder %s24, 0
      %p135 = por %p133, %p134
      %s137 = sadd.s32 %s136, 1
      %p140 = scmp.eq.s32.totalorder %s18, 1
      %p141 = scmp.ne.s32.totalorder %s136, %s138
      %p142 = scmp.eq.s32.totalorder %s18, 0
      %p143 = por %p141, %p142
      %p144 = scmp.ne.s32.totalorder %s136, %s138
      %p145 = scmp.eq.s32.totalorder %s23, 1
      %p146 = por %p144, %p145
      %p147 = scmp.ne.s32.totalorder %s138, %s139
      %p148 = scmp.eq.s32.totalorder %s23, 0
      %p149 = por %p147, %p148
      %p150 = scmp.ne.s32.totalorder %s138, %s139
      %p151 = scmp.eq.s32.totalorder %s24, 1
      %p152 = por %p150, %p151
      %p154 = scmp.ne.s32.totalorder %s139, %s153
      %p155 = scmp.eq.s32.totalorder %s24, 0
      %p156 = por %p154, %p155
      %s158 = sadd.s32 %s157, 1
      %p161 = scmp.eq.s32.totalorder %s18, 1
      %p162 = scmp.ne.s32.totalorder %s157, %s159
      %p163 = scmp.eq.s32.totalorder %s18, 0
      %p164 = por %p162, %p163
      %p165 = scmp.ne.s32.totalorder %s157, %s159
      %p166 = scmp.eq.s32.totalorder %s23, 1
      %p167 = por %p165, %p166
      %p168 = scmp.ne.s32.totalorder %s159, %s160
      %p169 = scmp.eq.s32.totalorder %s23, 0
      %p170 = por %p168, %p169
      %p171 = scmp.ne.s32.totalorder %s159, %s160
      %p172 = scmp.eq.s32.totalorder %s24, 1
      %p173 = por %p171, %p172
      %p175 = scmp.ne.s32.totalorder %s160, %s174
      %p176 = scmp.eq.s32.totalorder %s24, 0
      %p177 = por %p175, %p176
      %s178 = ssub.s32 %s18, %s25
      %p179 = scmp.eq.s32.totalorder %s178, 0
      %s181 = sadd.s32 %s180, 1
      %s182 = scalar_select %p179, %s180, %s181
      %p185 = pneg %p179
      %p186 = scmp.eq.s32.totalorder %s18, 1
      %p187 = por %p185, %p186
      %p188 = scmp.ne.s32.totalorder %s180, %s183
      %p189 = scmp.eq.s32.totalorder %s18, 0
      %p190 = por %p188, %p189
      %p191 = scmp.ne.s32.totalorder %s180, %s183
      %p192 = scmp.eq.s32.totalorder %s23, 1
      %p193 = por %p191, %p192
      %p194 = scmp.ne.s32.totalorder %s183, %s184
      %p195 = scmp.eq.s32.totalorder %s23, 0
      %p196 = por %p194, %p195
      %p197 = scmp.ne.s32.totalorder %s183, %s184
      %p198 = scmp.eq.s32.totalorder %s24, 1
      %p199 = por %p197, %p198
      %p201 = scmp.ne.s32.totalorder %s184, %s200
      %p202 = scmp.eq.s32.totalorder %s24, 0
      %p203 = por %p201, %p202
      %p204 = scmp.le.s32.totalorder 1, %s18
      %p205 = scmp.lt.s32.totalorder %s18, 3
      %p206 = pnand %p204, %p205
      %p207 = pneg %p206
      // Predicated region
      $region9: #{tpu_custom_call.1} parent=5 // pred_check
        _
      $region10: #{tpu_custom_call.1} parent=5 // pred_check_branch
        %209 = sbr.rel (%p206) target = $region12
      $region11: #{tpu_custom_call.1} parent=5 // pred_region
        %s210 = ssub.s32 %s18, 1
        // Predicated region
        $region13: #{tpu_custom_call.1} parent=11 // pred_check
          %p211 = pneg %p65
        $region14: #{tpu_custom_call.1} parent=11 // pred_check_branch
          %213 = sbr.rel (%p211) target = $region16
        $region15: #{tpu_custom_call.1} parent=11 // pred_region
          %s215 = ssub.s32 576, 576
          %216 = vsyncadd [#allocation4], %s215
          %s217 = sshll.u32 [#allocation3], 4
          %s218 = int_to_ptr.vmem [resolvable:$true] %s217
          %223 = dma.hbm_to_vmem [thread:$0]  %s1, 576, %s218, [#allocation4], 64, 64, 4
        $region16: #{tpu_custom_call.1} parent=11 // pred_fallthru
          _
        // Predicated region
        $region17: #{tpu_custom_call.1} parent=11 // pred_check
          %p224 = pneg %p86
        $region18: #{tpu_custom_call.1} parent=11 // pred_check_branch
          %226 = sbr.rel (%p224) target = $region20
        $region19: #{tpu_custom_call.1} parent=11 // pred_region
          %s228 = ssub.s32 576, 576
          %229 = vsyncadd [#allocation7], %s228
          %s230 = sshll.u32 [#allocation6], 4
          %s231 = int_to_ptr.vmem [resolvable:$true] %s230
          %236 = dma.hbm_to_vmem [thread:$0]  %s2, 576, %s231, [#allocation7], 64, 64, 4
        $region20: #{tpu_custom_call.1} parent=11 // pred_fallthru
          _
        // Predicated region
        $region21: #{tpu_custom_call.1} parent=11 // pred_check
          %p237 = pneg %p107
        $region22: #{tpu_custom_call.1} parent=11 // pred_check_branch
          %239 = sbr.rel (%p237) target = $region24
        $region23: #{tpu_custom_call.1} parent=11 // pred_region
          _
        $region24: #{tpu_custom_call.1} parent=11 // pred_fallthru
          _
        // Predicated region
        $region25: #{tpu_custom_call.1} parent=11 // pred_check
          %p240 = pneg %p128
        $region26: #{tpu_custom_call.1} parent=11 // pred_check_branch
          %242 = sbr.rel (%p240) target = $region28
        $region27: #{tpu_custom_call.1} parent=11 // pred_region
          _
        $region28: #{tpu_custom_call.1} parent=11 // pred_fallthru
          _
        // Predicated region
        $region29: #{tpu_custom_call.1} parent=11 // pred_check
          %p243 = pneg %p149
        $region30: #{tpu_custom_call.1} parent=11 // pred_check_branch
          %245 = sbr.rel (%p243) target = $region32
        $region31: #{tpu_custom_call.1} parent=11 // pred_region
          _
        $region32: #{tpu_custom_call.1} parent=11 // pred_fallthru
          _
        // Predicated region
        $region33: #{tpu_custom_call.1} parent=11 // pred_check
          %p246 = pneg %p170
        $region34: #{tpu_custom_call.1} parent=11 // pred_check_branch
          %248 = sbr.rel (%p246) target = $region36
        $region35: #{tpu_custom_call.1} parent=11 // pred_region
          _
        $region36: #{tpu_custom_call.1} parent=11 // pred_fallthru
          _
      $region12: #{tpu_custom_call.1} parent=5 // pred_fallthru
        _
      %p249 = scmp.lt.s32.totalorder %s18, 2
      // Predicated region
      $region37: #{tpu_custom_call.1} parent=5 // pred_check
        %p250 = pneg %p249
      $region38: #{tpu_custom_call.1} parent=5 // pred_check_branch
        %252 = sbr.rel (%p250) target = $region40
      $region39: #{tpu_custom_call.1} parent=5 // pred_region
        // Predicated region
        $region41: #{tpu_custom_call.1} parent=39 // pred_check
          %p253 = pneg %p38
        $region42: #{tpu_custom_call.1} parent=39 // pred_check_branch
          %255 = sbr.rel (%p253) target = $region44
        $region43: #{tpu_custom_call.1} parent=39 // pred_region
          %p256 = scmp.lt.s32.totalorder %s18, 1
          %s257 = scalar_select %p256, %s18, 1
          %s258 = smul.addr %s257, 2
          %s259 = smul.addr %s258, 4
          %s260 = scalar_lea.vmem %s0, %s259
        $region44: #{tpu_custom_call.1} parent=39 // pred_fallthru
          _
      $region40: #{tpu_custom_call.1} parent=5 // pred_fallthru
        _
      %p261 = scmp.le.s32.totalorder 1, %s18
      %p262 = scmp.lt.s32.totalorder %s18, 3
      %p263 = pnand %p261, %p262
      %p264 = pneg %p263
      // Predicated region
      $region45: #{tpu_custom_call.1} parent=5 // pred_check
        _
      $region46: #{tpu_custom_call.1} parent=5 // pred_check_branch
        %266 = sbr.rel (%p263) target = $region48
      $region47: #{tpu_custom_call.1} parent=5 // pred_region
        %s267 = ssub.s32 %s18, 1
        // Predicated region
        $region49: #{tpu_custom_call.1} parent=47 // pred_check
          %p268 = pneg %p65
        $region50: #{tpu_custom_call.1} parent=47 // pred_check_branch
          %270 = sbr.rel (%p268) target = $region52
        $region51: #{tpu_custom_call.1} parent=47 // pred_region
          %271 = dma.done [#allocation4], 576
        $region52: #{tpu_custom_call.1} parent=47 // pred_fallthru
          _
        // Predicated region
        $region53: #{tpu_custom_call.1} parent=47 // pred_check
          %p272 = pneg %p86
        $region54: #{tpu_custom_call.1} parent=47 // pred_check_branch
          %274 = sbr.rel (%p272) target = $region56
        $region55: #{tpu_custom_call.1} parent=47 // pred_region
          %275 = dma.done [#allocation7], 576
        $region56: #{tpu_custom_call.1} parent=47 // pred_fallthru
          _
        %p276 = scmp.lt.s32.totalorder %s23, 1
        %s277 = scalar_select %p276, %s23, 1
        %s278 = smul.addr %s277, 2
        %s279 = smul.addr %s278, 4
        %s280 = scalar_lea.vmem %s0, %s279
        %p281 = pneg %p44
        %p282 = pneg %p41
        %p283 = pneg %p65
        %p284 = pneg %p62
        %p285 = pneg %p86
        %p286 = pneg %p83
        %p287 = pneg %p107
        %p288 = pneg %p104
        %p289 = pneg %p128
        %p290 = pneg %p125
        %p291 = pneg %p149
        %p292 = pneg %p146
        %p293 = pneg %p170
        %p294 = pneg %p167
        %p295 = pneg %p196
        %p296 = pneg %p193
        %s297 = sand.u32 %s183, 1
        %s298 = scalar_lea.sflag [#allocation5], %s297
        %s299 = sand.u32 %s183, 1
        %s300 = smul.addr %s299, 8
        %s301 = scalar_lea.vmem [#allocation8], %s300
        %p302 = scmp.lt.s32.totalorder %s23, 1
        %s303 = scalar_select %p302, %s23, 1
        %s304 = smul.addr %s303, 2
        %s305 = smul.addr %s304, 4
        %s306 = scalar_lea.vmem %s0, %s305
        %v307 = vlaneseq
        %v308 = vand.u32 %v307, 127
        %v309 = vadd.s32 %v308, 128
        %vm310 = vcmp.lt.s32.totalorder %v308, 0
        %v311 = vsub.s32 0, %v308
        %v312 = vsel %vm310, %v311, %v308
        %v313 = vshrl.u32 %v312, 4
        %v314 = vand.u32 %v312, 15
        %v315 = vsub.s32 0, %v314
        %v316 = vsel %vm310, %v315, %v314
        %vm317 = vcmp.lt.s32.totalorder %v309, 0
        %v318 = vsub.s32 0, %v309
        %v319 = vsel %vm317, %v318, %v309
        %v320 = vshrl.u32 %v319, 4
        %v321 = vand.u32 %v319, 15
        %v322 = vsub.s32 0, %v321
        %v323 = vsel %vm317, %v322, %v321
        %vm324 = vcmp.ne.s32.totalorder %v316, 0
        %vm325 = vcmp.ne.s32.totalorder %v323, 0
        %vm326 = vcmp.lt.s32.totalorder %v316, 0
        %vm327 = vcmp.lt.s32.totalorder %v323, 0
        %vm328 = vmand %vm326, %vm324
        %vm329 = vmand %vm327, %vm325
        %v330 = vadd.s32 %v316, 16
        %v331 = vadd.s32 %v323, 16
        %v332 = vsel %vm328, %v330, %v316
        %v333 = vsel %vm329, %v331, %v323
        %vm334 = vcmp.ne.s32.totalorder %v332, 0
        %vm335 = vcmp.ne.s32.totalorder %v333, 0
        %v336 = vsel %vm334, 1, 0
        %v337 = vsel %vm335, 1, 0
        %v338 = vcvt.s32.f32 %v336
        %v339 = vcvt.s32.f32 %v337
        %vm340 = vcmp.ne.s32.totalorder %v332, 15
        %vm341 = vcmp.ne.s32.totalorder %v333, 15
        %v342 = vsel %vm340, 1, 0
        %v343 = vsel %vm341, 1, 0
        %v344 = vcvt.s32.f32 %v342
        %v345 = vcvt.s32.f32 %v343
        %vm346 = vcmask 134144
        %347 = vst.msk [vmem:[#allocation2] sm:$0xf] %vm346, 0.0
        %vm348 = vcmask 273544
        %349 = vst.msk [vmem:[#allocation2 + $0x8] sm:$0xf] %vm348, 0.0
        %v350 = vld [vmem:[%s306] sm:$0xff]
        %352 = vrot.lane.b32.xlu0 %v350, 17
        %v353 = vpop.permute.xlu0 %352
        %v354 = vrot.slane %v353, 4
        %vm355 = vcmask 138240
        %v356 = vsel %vm355, %v354, %v353
        %vm359 = vcmask 1043592
        %vm360 = vcmask 1047556
        %vm361 = vmor %vm360, %vm359
        %362 = vst.msk [vmem:[#allocation2] sm:$0xff] %vm361, %v356
        %363 = vst.msk [vmem:[#allocation2 + $0x8] sm:$0xf] %vm346, %v354
        %v364 = vld [vmem:[#allocation2] sm:$0xff]
        %v367 = vcombine.low %v338, %v339
        %v369 = vmul.f32 %v364, %v367
        %v370 = vld [vmem:[#allocation3] sm:$0xf]
        %v371 = vld [vmem:[#allocation2 + $0x8] sm:$0xf]
        %s372 = scalar_lea.vmem [#allocation3], 4
        %v373 = vld [vmem:[%s372] sm:$0xf]
        %v376 = vcombine.high %v364, %v364
        %377 = vrot.lane.b32.xlu0 %v364, 127
        %v378 = vpop.permute.xlu0 %377
        %379 = vrot.lane.b32.xlu0 %v376, 127
        %v380 = vpop.permute.xlu0 %379
        %381 = vrot.lane.b32.xlu0 %v371, 127
        %v382 = vpop.permute.xlu0 %381
        %vm383 = vcmask 1039360
        %v384 = vsel %vm383, %v378, %v380
        %v385 = vsel %vm383, %v380, %v382
        %vm386 = vcmask 31744
        %v388 = vsel %vm386, %v373, 0
        %vm390 = vcmask 1043456
        %v391 = vsel %vm390, %v384, 0
        %v393 = vsel %vm390, %v385, 0
        %395 = vmatprep.subr.mxu0 %v393
        %396 = vmatpush1.msra.mxu0 %v391
        %397 = vmatprep.subr.mxu0 0.0
        %398 = vmatpush1.msra.mxu0 0.0
        %399 = vmatprep.subr.mxu0 0.0
        %400 = vmatpush1.msra.mxu0 0.0
        %401 = vmatprep.subr.mxu0 0.0
        %402 = vmatpush1.msra.mxu0 0.0
        %403 = vmatprep.subr.mxu0 0.0
        %404 = vmatpush1.msra.mxu0 0.0
        %405 = vmatprep.subr.mxu0 0.0
        %406 = vmatpush1.msra.mxu0 0.0
        %407 = vmatprep.subr.mxu0 0.0
        %408 = vmatpush1.msra.mxu0 0.0
        %409 = vmatprep.subr.mxu0 0.0
        %410 = vmatpush1.msra.mxu0 0.0
        %411 = vmatprep.subr.mxu0 0.0
        %412 = vmatpush1.msra.mxu0 0.0
        %413 = vmatprep.subr.mxu0 0.0
        %414 = vmatpush1.msra.mxu0 0.0
        %415 = vmatprep.subr.mxu0 0.0
        %416 = vmatpush1.msra.mxu0 0.0
        %417 = vmatprep.subr.mxu0 0.0
        %418 = vmatpush1.msra.mxu0 0.0
        %419 = vmatprep.subr.mxu0 0.0
        %420 = vmatpush1.msra.mxu0 0.0
        %421 = vmatprep.subr.mxu0 0.0
        %422 = vmatpush1.msra.mxu0 0.0
        %423 = vmatprep.subr.mxu0 0.0
        %424 = vmatpush1.msra.mxu0 0.0
        %425 = vmatprep.subr.mxu0 0.0
        %426 = vmatpush1.msra.mxu0 0.0
        %427 = vmatprep.subr.mxu0 0.0
        %428 = vmatpush1.msra.mxu0 0.0
        %429 = vmatprep.subr.mxu0 0.0
        %430 = vmatpush1.msra.mxu0 0.0
        %431 = vmatprep.subr.mxu0 0.0
        %432 = vmatpush1.msra.mxu0 0.0
        %433 = vmatprep.subr.mxu0 0.0
        %434 = vmatpush1.msra.mxu0 0.0
        %435 = vmatprep.subr.mxu0 0.0
        %436 = vmatpush1.msra.mxu0 0.0
        %437 = vmatprep.subr.mxu0 0.0
        %438 = vmatpush1.msra.mxu0 0.0
        %439 = vmatprep.subr.mxu0 0.0
        %440 = vmatpush1.msra.mxu0 0.0
        %441 = vmatprep.subr.mxu0 0.0
        %442 = vmatpush1.msra.mxu0 0.0
        %443 = vmatprep.subr.mxu0 0.0
        %444 = vmatpush1.msra.mxu0 0.0
        %445 = vmatprep.subr.mxu0 0.0
        %446 = vmatpush1.msra.mxu0 0.0
        %447 = vmatprep.subr.mxu0 0.0
        %448 = vmatpush1.msra.mxu0 0.0
        %449 = vmatprep.subr.mxu0 0.0
        %450 = vmatpush1.msra.mxu0 0.0
        %451 = vmatprep.subr.mxu0 0.0
        %452 = vmatpush1.msra.mxu0 0.0
        %453 = vmatprep.subr.mxu0 0.0
        %454 = vmatpush1.msra.mxu0 0.0
        %455 = vmatprep.subr.mxu0 0.0
        %456 = vmatpush1.msra.mxu0 0.0
        %457 = vmatprep.subr.mxu0 0.0
        %458 = vmatpush1.msra.mxu0 0.0
        %459 = vmatprep.mubr.f32.mxu0 0.0
        %460 = vmatmul.mubr.f32.gmra.mrb[0].mxu0 %v388
        %v461 = vpop.f32.mrb[0].mxu0
        %v462 = vadd.f32 0.0, %v461
        %v463 = vpop.f32.mrb[0].mxu0
        %v464 = vadd.f32 0.0, %v463
        %465 = vdwg.mxu0
        %v467 = vcombine.high %v369, %v369
        %v469 = vsel %vm386, %v370, 0
        %v471 = vsel %vm390, %v369, 0
        %v473 = vsel %vm390, %v467, 0
        %475 = vmatprep.subr.mxu0 %v473
        %476 = vmatpush1.msra.mxu0 %v471
        %477 = vmatprep.subr.mxu0 0.0
        %478 = vmatpush1.msra.mxu0 0.0
        %479 = vmatprep.subr.mxu0 0.0
        %480 = vmatpush1.msra.mxu0 0.0
        %481 = vmatprep.subr.mxu0 0.0
        %482 = vmatpush1.msra.mxu0 0.0
        %483 = vmatprep.subr.mxu0 0.0
        %484 = vmatpush1.msra.mxu0 0.0
        %485 = vmatprep.subr.mxu0 0.0
        %486 = vmatpush1.msra.mxu0 0.0
        %487 = vmatprep.subr.mxu0 0.0
        %488 = vmatpush1.msra.mxu0 0.0
        %489 = vmatprep.subr.mxu0 0.0
        %490 = vmatpush1.msra.mxu0 0.0
        %491 = vmatprep.subr.mxu0 0.0
        %492 = vmatpush1.msra.mxu0 0.0
        %493 = vmatprep.subr.mxu0 0.0
        %494 = vmatpush1.msra.mxu0 0.0
        %495 = vmatprep.subr.mxu0 0.0
        %496 = vmatpush1.msra.mxu0 0.0
        %497 = vmatprep.subr.mxu0 0.0
        %498 = vmatpush1.msra.mxu0 0.0
        %499 = vmatprep.subr.mxu0 0.0
        %500 = vmatpush1.msra.mxu0 0.0
        %501 = vmatprep.subr.mxu0 0.0
        %502 = vmatpush1.msra.mxu0 0.0
        %503 = vmatprep.subr.mxu0 0.0
        %504 = vmatpush1.msra.mxu0 0.0
        %505 = vmatprep.subr.mxu0 0.0
        %506 = vmatpush1.msra.mxu0 0.0
        %507 = vmatprep.subr.mxu0 0.0
        %508 = vmatpush1.msra.mxu0 0.0
        %509 = vmatprep.subr.mxu0 0.0
        %510 = vmatpush1.msra.mxu0 0.0
        %511 = vmatprep.subr.mxu0 0.0
        %512 = vmatpush1.msra.mxu0 0.0
        %513 = vmatprep.subr.mxu0 0.0
        %514 = vmatpush1.msra.mxu0 0.0
        %515 = vmatprep.subr.mxu0 0.0
        %516 = vmatpush1.msra.mxu0 0.0
        %517 = vmatprep.subr.mxu0 0.0
        %518 = vmatpush1.msra.mxu0 0.0
        %519 = vmatprep.subr.mxu0 0.0
        %520 = vmatpush1.msra.mxu0 0.0
        %521 = vmatprep.subr.mxu0 0.0
        %522 = vmatpush1.msra.mxu0 0.0
        %523 = vmatprep.subr.mxu0 0.0
        %524 = vmatpush1.msra.mxu0 0.0
        %525 = vmatprep.subr.mxu0 0.0
        %526 = vmatpush1.msra.mxu0 0.0
        %527 = vmatprep.subr.mxu0 0.0
        %528 = vmatpush1.msra.mxu0 0.0
        %529 = vmatprep.subr.mxu0 0.0
        %530 = vmatpush1.msra.mxu0 0.0
        %531 = vmatprep.subr.mxu0 0.0
        %532 = vmatpush1.msra.mxu0 0.0
        %533 = vmatprep.subr.mxu0 0.0
        %534 = vmatpush1.msra.mxu0 0.0
        %535 = vmatprep.subr.mxu0 0.0
        %536 = vmatpush1.msra.mxu0 0.0
        %537 = vmatprep.subr.mxu0 0.0
        %538 = vmatpush1.msra.mxu0 0.0
        %539 = vmatprep.mubr.f32.mxu0 0.0
        %540 = vmatmul.mubr.f32.gmra.mrb[0].mxu0 %v469
        %v541 = vpop.f32.mrb[0].mxu0
        %v542 = vadd.f32 %v462, %v541
        %v543 = vpop.f32.mrb[0].mxu0
        %v544 = vadd.f32 %v464, %v543
        %545 = vdwg.mxu0
        %v546 = vld [vmem:[#allocation2] sm:$0xff]
        %v547 = vld [vmem:[#allocation2 + $0x8] sm:$0xf]
        %v550 = vcombine.low %v344, %v345
        %551 = vrot.lane.b32.xlu0 %v550, 2
        %v552 = vpop.permute.xlu0 %551
        %v553 = vrot.slane %v552, 4
        %vm554 = vcmask 15360
        %v555 = vsel %vm554, %v553, %v552
        %v558 = vmul.f32 %v546, %v555
        %v559 = vmul.f32 %v547, %v553
        %s560 = scalar_lea.vmem [#allocation3], 8
        %v561 = vld [vmem:[%s560] sm:$0xf]
        %v564 = vcombine.high %v558, %v558
        %565 = vrot.lane.b32.xlu0 %v558, 126
        %v566 = vpop.permute.xlu0 %565
        %567 = vrot.lane.b32.xlu0 %v564, 126
        %v568 = vpop.permute.xlu0 %567
        %569 = vrot.lane.b32.xlu0 %v559, 126
        %v570 = vpop.permute.xlu0 %569
        %vm571 = vcmask 1031168
        %v572 = vsel %vm571, %v566, %v568
        %v573 = vsel %vm571, %v568, %v570
        %v575 = vsel %vm386, %v561, 0
        %v577 = vsel %vm390, %v572, 0
        %v579 = vsel %vm390, %v573, 0
        %581 = vmatprep.subr.mxu0 %v579
        %582 = vmatpush1.msra.mxu0 %v577
        %583 = vmatprep.subr.mxu0 0.0
        %584 = vmatpush1.msra.mxu0 0.0
        %585 = vmatprep.subr.mxu0 0.0
        %586 = vmatpush1.msra.mxu0 0.0
        %587 = vmatprep.subr.mxu0 0.0
        %588 = vmatpush1.msra.mxu0 0.0
        %589 = vmatprep.subr.mxu0 0.0
        %590 = vmatpush1.msra.mxu0 0.0
        %591 = vmatprep.subr.mxu0 0.0
        %592 = vmatpush1.msra.mxu0 0.0
        %593 = vmatprep.subr.mxu0 0.0
        %594 = vmatpush1.msra.mxu0 0.0
        %595 = vmatprep.subr.mxu0 0.0
        %596 = vmatpush1.msra.mxu0 0.0
        %597 = vmatprep.subr.mxu0 0.0
        %598 = vmatpush1.msra.mxu0 0.0
        %599 = vmatprep.subr.mxu0 0.0
        %600 = vmatpush1.msra.mxu0 0.0
        %601 = vmatprep.subr.mxu0 0.0
        %602 = vmatpush1.msra.mxu0 0.0
        %603 = vmatprep.subr.mxu0 0.0
        %604 = vmatpush1.msra.mxu0 0.0
        %605 = vmatprep.subr.mxu0 0.0
        %606 = vmatpush1.msra.mxu0 0.0
        %607 = vmatprep.subr.mxu0 0.0
        %608 = vmatpush1.msra.mxu0 0.0
        %609 = vmatprep.subr.mxu0 0.0
        %610 = vmatpush1.msra.mxu0 0.0
        %611 = vmatprep.subr.mxu0 0.0
        %612 = vmatpush1.msra.mxu0 0.0
        %613 = vmatprep.subr.mxu0 0.0
        %614 = vmatpush1.msra.mxu0 0.0
        %615 = vmatprep.subr.mxu0 0.0
        %616 = vmatpush1.msra.mxu0 0.0
        %617 = vmatprep.subr.mxu0 0.0
        %618 = vmatpush1.msra.mxu0 0.0
        %619 = vmatprep.subr.mxu0 0.0
        %620 = vmatpush1.msra.mxu0 0.0
        %621 = vmatprep.subr.mxu0 0.0
        %622 = vmatpush1.msra.mxu0 0.0
        %623 = vmatprep.subr.mxu0 0.0
        %624 = vmatpush1.msra.mxu0 0.0
        %625 = vmatprep.subr.mxu0 0.0
        %626 = vmatpush1.msra.mxu0 0.0
        %627 = vmatprep.subr.mxu0 0.0
        %628 = vmatpush1.msra.mxu0 0.0
        %629 = vmatprep.subr.mxu0 0.0
        %630 = vmatpush1.msra.mxu0 0.0
        %631 = vmatprep.subr.mxu0 0.0
        %632 = vmatpush1.msra.mxu0 0.0
        %633 = vmatprep.subr.mxu0 0.0
        %634 = vmatpush1.msra.mxu0 0.0
        %635 = vmatprep.subr.mxu0 0.0
        %636 = vmatpush1.msra.mxu0 0.0
        %637 = vmatprep.subr.mxu0 0.0
        %638 = vmatpush1.msra.mxu0 0.0
        %639 = vmatprep.subr.mxu0 0.0
        %640 = vmatpush1.msra.mxu0 0.0
        %641 = vmatprep.subr.mxu0 0.0
        %642 = vmatpush1.msra.mxu0 0.0
        %643 = vmatprep.subr.mxu0 0.0
        %644 = vmatpush1.msra.mxu0 0.0
        %645 = vmatprep.mubr.f32.mxu0 0.0
        %646 = vmatmul.mubr.f32.gmra.mrb[0].mxu0 %v575
        %v647 = vpop.f32.mrb[0].mxu0
        %v648 = vadd.f32 0.0, %v647
        %v649 = vpop.f32.mrb[0].mxu0
        %v650 = vadd.f32 0.0, %v649
        %651 = vdwg.mxu0
        %v652 = vadd.f32 %v542, %v648
        %v653 = vadd.f32 %v544, %v650
        %v654 = vld [vmem:[#allocation2] sm:$0xff]
        %v655 = vld [vmem:[#allocation2 + $0x8] sm:$0xf]
        %656 = vrot.lane.b32.xlu0 %v367, 16
        %v657 = vpop.permute.xlu0 %656
        %v658 = vrot.slane %v657, 4
        %vm659 = vcmask 130048
        %v660 = vsel %vm659, %v658, %v657
        %v663 = vmul.f32 %v654, %v660
        %v664 = vmul.f32 %v655, %v658
        %s665 = scalar_lea.vmem [#allocation3], 12
        %v666 = vld [vmem:[%s665] sm:$0xf]
        %v669 = vcombine.high %v663, %v663
        %670 = vrot.lane.b32.xlu0 %v663, 112
        %v671 = vpop.permute.xlu0 %670
        %672 = vrot.lane.b32.xlu0 %v669, 112
        %v673 = vpop.permute.xlu0 %672
        %674 = vrot.lane.b32.xlu0 %v664, 112
        %v675 = vpop.permute.xlu0 %674
        %vm676 = vcmask 916480
        %v677 = vsel %vm676, %v671, %v673
        %v678 = vsel %vm676, %v673, %v675
        %v680 = vsel %vm386, %v666, 0
        %v682 = vsel %vm390, %v677, 0
        %v684 = vsel %vm390, %v678, 0
        %686 = vmatprep.subr.mxu0 %v684
        %687 = vmatpush1.msra.mxu0 %v682
        %688 = vmatprep.subr.mxu0 0.0
        %689 = vmatpush1.msra.mxu0 0.0
        %690 = vmatprep.subr.mxu0 0.0
        %691 = vmatpush1.msra.mxu0 0.0
        %692 = vmatprep.subr.mxu0 0.0
        %693 = vmatpush1.msra.mxu0 0.0
        %694 = vmatprep.subr.mxu0 0.0
        %695 = vmatpush1.msra.mxu0 0.0
        %696 = vmatprep.subr.mxu0 0.0
        %697 = vmatpush1.msra.mxu0 0.0
        %698 = vmatprep.subr.mxu0 0.0
        %699 = vmatpush1.msra.mxu0 0.0
        %700 = vmatprep.subr.mxu0 0.0
        %701 = vmatpush1.msra.mxu0 0.0
        %702 = vmatprep.subr.mxu0 0.0
        %703 = vmatpush1.msra.mxu0 0.0
        %704 = vmatprep.subr.mxu0 0.0
        %705 = vmatpush1.msra.mxu0 0.0
        %706 = vmatprep.subr.mxu0 0.0
        %707 = vmatpush1.msra.mxu0 0.0
        %708 = vmatprep.subr.mxu0 0.0
        %709 = vmatpush1.msra.mxu0 0.0
        %710 = vmatprep.subr.mxu0 0.0
        %711 = vmatpush1.msra.mxu0 0.0
        %712 = vmatprep.subr.mxu0 0.0
        %713 = vmatpush1.msra.mxu0 0.0
        %714 = vmatprep.subr.mxu0 0.0
        %715 = vmatpush1.msra.mxu0 0.0
        %716 = vmatprep.subr.mxu0 0.0
        %717 = vmatpush1.msra.mxu0 0.0
        %718 = vmatprep.subr.mxu0 0.0
        %719 = vmatpush1.msra.mxu0 0.0
        %720 = vmatprep.subr.mxu0 0.0
        %721 = vmatpush1.msra.mxu0 0.0
        %722 = vmatprep.subr.mxu0 0.0
        %723 = vmatpush1.msra.mxu0 0.0
        %724 = vmatprep.subr.mxu0 0.0
        %725 = vmatpush1.msra.mxu0 0.0
        %726 = vmatprep.subr.mxu0 0.0
        %727 = vmatpush1.msra.mxu0 0.0
        %728 = vmatprep.subr.mxu0 0.0
        %729 = vmatpush1.msra.mxu0 0.0
        %730 = vmatprep.subr.mxu0 0.0
        %731 = vmatpush1.msra.mxu0 0.0
        %732 = vmatprep.subr.mxu0 0.0
        %733 = vmatpush1.msra.mxu0 0.0
        %734 = vmatprep.subr.mxu0 0.0
        %735 = vmatpush1.msra.mxu0 0.0
        %736 = vmatprep.subr.mxu0 0.0
        %737 = vmatpush1.msra.mxu0 0.0
        %738 = vmatprep.subr.mxu0 0.0
        %739 = vmatpush1.msra.mxu0 0.0
        %740 = vmatprep.subr.mxu0 0.0
        %741 = vmatpush1.msra.mxu0 0.0
        %742 = vmatprep.subr.mxu0 0.0
        %743 = vmatpush1.msra.mxu0 0.0
        %744 = vmatprep.subr.mxu0 0.0
        %745 = vmatpush1.msra.mxu0 0.0
        %746 = vmatprep.subr.mxu0 0.0
        %747 = vmatpush1.msra.mxu0 0.0
        %748 = vmatprep.subr.mxu0 0.0
        %749 = vmatpush1.msra.mxu0 0.0
        %750 = vmatprep.mubr.f32.mxu0 0.0
        %751 = vmatmul.mubr.f32.gmra.mrb[0].mxu0 %v680
        %v752 = vpop.f32.mrb[0].mxu0
        %v753 = vadd.f32 0.0, %v752
        %v754 = vpop.f32.mrb[0].mxu0
        %v755 = vadd.f32 0.0, %v754
        %756 = vdwg.mxu0
        %v757 = vadd.f32 %v652, %v753
        %v758 = vadd.f32 %v653, %v755
        %v759 = vld [vmem:[#allocation2] sm:$0xff]
        %v760 = vld [vmem:[#allocation2 + $0x8] sm:$0xf]
        %s761 = scalar_lea.vmem [#allocation3], 16
        %v762 = vld [vmem:[%s761] sm:$0xf]
        %v765 = vcombine.high %v759, %v759
        %766 = vrot.lane.b32.xlu0 %v759, 111
        %v767 = vpop.permute.xlu0 %766
        %768 = vrot.lane.b32.xlu0 %v765, 111
        %v769 = vpop.permute.xlu0 %768
        %770 = vrot.lane.b32.xlu0 %v760, 111
        %v771 = vpop.permute.xlu0 %770
        %vm772 = vcmask 908288
        %v773 = vsel %vm772, %v767, %v769
        %v774 = vsel %vm772, %v769, %v771
        %v776 = vsel %vm386, %v762, 0
        %v778 = vsel %vm390, %v773, 0
        %v780 = vsel %vm390, %v774, 0
        %782 = vmatprep.subr.mxu0 %v780
        %783 = vmatpush1.msra.mxu0 %v778
        %784 = vmatprep.subr.mxu0 0.0
        %785 = vmatpush1.msra.mxu0 0.0
        %786 = vmatprep.subr.mxu0 0.0
        %787 = vmatpush1.msra.mxu0 0.0
        %788 = vmatprep.subr.mxu0 0.0
        %789 = vmatpush1.msra.mxu0 0.0
        %790 = vmatprep.subr.mxu0 0.0
        %791 = vmatpush1.msra.mxu0 0.0
        %792 = vmatprep.subr.mxu0 0.0
        %793 = vmatpush1.msra.mxu0 0.0
        %794 = vmatprep.subr.mxu0 0.0
        %795 = vmatpush1.msra.mxu0 0.0
        %796 = vmatprep.subr.mxu0 0.0
        %797 = vmatpush1.msra.mxu0 0.0
        %798 = vmatprep.subr.mxu0 0.0
        %799 = vmatpush1.msra.mxu0 0.0
        %800 = vmatprep.subr.mxu0 0.0
        %801 = vmatpush1.msra.mxu0 0.0
        %802 = vmatprep.subr.mxu0 0.0
        %803 = vmatpush1.msra.mxu0 0.0
        %804 = vmatprep.subr.mxu0 0.0
        %805 = vmatpush1.msra.mxu0 0.0
        %806 = vmatprep.subr.mxu0 0.0
        %807 = vmatpush1.msra.mxu0 0.0
        %808 = vmatprep.subr.mxu0 0.0
        %809 = vmatpush1.msra.mxu0 0.0
        %810 = vmatprep.subr.mxu0 0.0
        %811 = vmatpush1.msra.mxu0 0.0
        %812 = vmatprep.subr.mxu0 0.0
        %813 = vmatpush1.msra.mxu0 0.0
        %814 = vmatprep.subr.mxu0 0.0
        %815 = vmatpush1.msra.mxu0 0.0
        %816 = vmatprep.subr.mxu0 0.0
        %817 = vmatpush1.msra.mxu0 0.0
        %818 = vmatprep.subr.mxu0 0.0
        %819 = vmatpush1.msra.mxu0 0.0
        %820 = vmatprep.subr.mxu0 0.0
        %821 = vmatpush1.msra.mxu0 0.0
        %822 = vmatprep.subr.mxu0 0.0
        %823 = vmatpush1.msra.mxu0 0.0
        %824 = vmatprep.subr.mxu0 0.0
        %825 = vmatpush1.msra.mxu0 0.0
        %826 = vmatprep.subr.mxu0 0.0
        %827 = vmatpush1.msra.mxu0 0.0
        %828 = vmatprep.subr.mxu0 0.0
        %829 = vmatpush1.msra.mxu0 0.0
        %830 = vmatprep.subr.mxu0 0.0
        %831 = vmatpush1.msra.mxu0 0.0
        %832 = vmatprep.subr.mxu0 0.0
        %833 = vmatpush1.msra.mxu0 0.0
        %834 = vmatprep.subr.mxu0 0.0
        %835 = vmatpush1.msra.mxu0 0.0
        %836 = vmatprep.subr.mxu0 0.0
        %837 = vmatpush1.msra.mxu0 0.0
        %838 = vmatprep.subr.mxu0 0.0
        %839 = vmatpush1.msra.mxu0 0.0
        %840 = vmatprep.subr.mxu0 0.0
        %841 = vmatpush1.msra.mxu0 0.0
        %842 = vmatprep.subr.mxu0 0.0
        %843 = vmatpush1.msra.mxu0 0.0
        %844 = vmatprep.subr.mxu0 0.0
        %845 = vmatpush1.msra.mxu0 0.0
        %846 = vmatprep.mubr.f32.mxu0 0.0
        %847 = vmatmul.mubr.f32.gmra.mrb[0].mxu0 %v776
        %v848 = vpop.f32.mrb[0].mxu0
        %v849 = vadd.f32 0.0, %v848
        %v850 = vpop.f32.mrb[0].mxu0
        %v851 = vadd.f32 0.0, %v850
        %852 = vdwg.mxu0
        %v853 = vadd.f32 %v757, %v849
        %v854 = vadd.f32 %v758, %v851
        %v855 = vld [vmem:[#allocation2] sm:$0xff]
        %v856 = vld [vmem:[#allocation2 + $0x8] sm:$0xf]
        %857 = vrot.lane.b32.xlu0 %v550, 18
        %v858 = vpop.permute.xlu0 %857
        %v859 = vrot.slane %v858, 4
        %vm860 = vcmask 146432
        %v861 = vsel %vm860, %v859, %v858
        %v864 = vmul.f32 %v855, %v861
        %v865 = vmul.f32 %v856, %v859
        %s866 = scalar_lea.vmem [#allocation3], 20
        %v867 = vld [vmem:[%s866] sm:$0xf]
        %v870 = vcombine.high %v864, %v864
        %871 = vrot.lane.b32.xlu0 %v864, 110
        %v872 = vpop.permute.xlu0 %871
        %873 = vrot.lane.b32.xlu0 %v870, 110
        %v874 = vpop.permute.xlu0 %873
        %875 = vrot.lane.b32.xlu0 %v865, 110
        %v876 = vpop.permute.xlu0 %875
        %vm877 = vcmask 900096
        %v878 = vsel %vm877, %v872, %v874
        %v879 = vsel %vm877, %v874, %v876
        %v881 = vsel %vm386, %v867, 0
        %v883 = vsel %vm390, %v878, 0
        %v885 = vsel %vm390, %v879, 0
        %887 = vmatprep.subr.mxu0 %v885
        %888 = vmatpush1.msra.mxu0 %v883
        %889 = vmatprep.subr.mxu0 0.0
        %890 = vmatpush1.msra.mxu0 0.0
        %891 = vmatprep.subr.mxu0 0.0
        %892 = vmatpush1.msra.mxu0 0.0
        %893 = vmatprep.subr.mxu0 0.0
        %894 = vmatpush1.msra.mxu0 0.0
        %895 = vmatprep.subr.mxu0 0.0
        %896 = vmatpush1.msra.mxu0 0.0
        %897 = vmatprep.subr.mxu0 0.0
        %898 = vmatpush1.msra.mxu0 0.0
        %899 = vmatprep.subr.mxu0 0.0
        %900 = vmatpush1.msra.mxu0 0.0
        %901 = vmatprep.subr.mxu0 0.0
        %902 = vmatpush1.msra.mxu0 0.0
        %903 = vmatprep.subr.mxu0 0.0
        %904 = vmatpush1.msra.mxu0 0.0
        %905 = vmatprep.subr.mxu0 0.0
        %906 = vmatpush1.msra.mxu0 0.0
        %907 = vmatprep.subr.mxu0 0.0
        %908 = vmatpush1.msra.mxu0 0.0
        %909 = vmatprep.subr.mxu0 0.0
        %910 = vmatpush1.msra.mxu0 0.0
        %911 = vmatprep.subr.mxu0 0.0
        %912 = vmatpush1.msra.mxu0 0.0
        %913 = vmatprep.subr.mxu0 0.0
        %914 = vmatpush1.msra.mxu0 0.0
        %915 = vmatprep.subr.mxu0 0.0
        %916 = vmatpush1.msra.mxu0 0.0
        %917 = vmatprep.subr.mxu0 0.0
        %918 = vmatpush1.msra.mxu0 0.0
        %919 = vmatprep.subr.mxu0 0.0
        %920 = vmatpush1.msra.mxu0 0.0
        %921 = vmatprep.subr.mxu0 0.0
        %922 = vmatpush1.msra.mxu0 0.0
        %923 = vmatprep.subr.mxu0 0.0
        %924 = vmatpush1.msra.mxu0 0.0
        %925 = vmatprep.subr.mxu0 0.0
        %926 = vmatpush1.msra.mxu0 0.0
        %927 = vmatprep.subr.mxu0 0.0
        %928 = vmatpush1.msra.mxu0 0.0
        %929 = vmatprep.subr.mxu0 0.0
        %930 = vmatpush1.msra.mxu0 0.0
        %931 = vmatprep.subr.mxu0 0.0
        %932 = vmatpush1.msra.mxu0 0.0
        %933 = vmatprep.subr.mxu0 0.0
        %934 = vmatpush1.msra.mxu0 0.0
        %935 = vmatprep.subr.mxu0 0.0
        %936 = vmatpush1.msra.mxu0 0.0
        %937 = vmatprep.subr.mxu0 0.0
        %938 = vmatpush1.msra.mxu0 0.0
        %939 = vmatprep.subr.mxu0 0.0
        %940 = vmatpush1.msra.mxu0 0.0
        %941 = vmatprep.subr.mxu0 0.0
        %942 = vmatpush1.msra.mxu0 0.0
        %943 = vmatprep.subr.mxu0 0.0
        %944 = vmatpush1.msra.mxu0 0.0
        %945 = vmatprep.subr.mxu0 0.0
        %946 = vmatpush1.msra.mxu0 0.0
        %947 = vmatprep.subr.mxu0 0.0
        %948 = vmatpush1.msra.mxu0 0.0
        %949 = vmatprep.subr.mxu0 0.0
        %950 = vmatpush1.msra.mxu0 0.0
        %951 = vmatprep.mubr.f32.mxu0 0.0
        %952 = vmatmul.mubr.f32.gmra.mrb[0].mxu0 %v881
        %v953 = vpop.f32.mrb[0].mxu0
        %v954 = vadd.f32 0.0, %v953
        %v955 = vpop.f32.mrb[0].mxu0
        %v956 = vadd.f32 0.0, %v955
        %957 = vdwg.mxu0
        %v958 = vadd.f32 %v853, %v954
        %v959 = vadd.f32 %v854, %v956
        %v960 = vld [vmem:[#allocation2] sm:$0xff]
        %v961 = vld [vmem:[#allocation2 + $0x8] sm:$0xf]
        %962 = vrot.lane.b32.xlu0 %v367, 32
        %v963 = vpop.permute.xlu0 %962
        %v964 = vrot.slane %v963, 4
        %vm965 = vcmask 261120
        %v966 = vsel %vm965, %v964, %v963
        %v969 = vmul.f32 %v960, %v966
        %v970 = vmul.f32 %v961, %v964
        %s971 = scalar_lea.vmem [#allocation3], 24
        %v972 = vld [vmem:[%s971] sm:$0xf]
        %v975 = vcombine.high %v969, %v969
        %976 = vrot.lane.b32.xlu0 %v969, 96
        %v977 = vpop.permute.xlu0 %976
        %978 = vrot.lane.b32.xlu0 %v975, 96
        %v979 = vpop.permute.xlu0 %978
        %980 = vrot.lane.b32.xlu0 %v970, 96
        %v981 = vpop.permute.xlu0 %980
        %vm982 = vcmask 785408
        %v983 = vsel %vm982, %v977, %v979
        %v984 = vsel %vm982, %v979, %v981
        %v986 = vsel %vm386, %v972, 0
        %v988 = vsel %vm390, %v983, 0
        %v990 = vsel %vm390, %v984, 0
        %992 = vmatprep.subr.mxu0 %v990
        %993 = vmatpush1.msra.mxu0 %v988
        %994 = vmatprep.subr.mxu0 0.0
        %995 = vmatpush1.msra.mxu0 0.0
        %996 = vmatprep.subr.mxu0 0.0
        %997 = vmatpush1.msra.mxu0 0.0
        %998 = vmatprep.subr.mxu0 0.0
        %999 = vmatpush1.msra.mxu0 0.0
        %1000 = vmatprep.subr.mxu0 0.0
        %1001 = vmatpush1.msra.mxu0 0.0
        %1002 = vmatprep.subr.mxu0 0.0
        %1003 = vmatpush1.msra.mxu0 0.0
        %1004 = vmatprep.subr.mxu0 0.0
        %1005 = vmatpush1.msra.mxu0 0.0
        %1006 = vmatprep.subr.mxu0 0.0
        %1007 = vmatpush1.msra.mxu0 0.0
        %1008 = vmatprep.subr.mxu0 0.0
        %1009 = vmatpush1.msra.mxu0 0.0
        %1010 = vmatprep.subr.mxu0 0.0
        %1011 = vmatpush1.msra.mxu0 0.0
        %1012 = vmatprep.subr.mxu0 0.0
        %1013 = vmatpush1.msra.mxu0 0.0
        %1014 = vmatprep.subr.mxu0 0.0
        %1015 = vmatpush1.msra.mxu0 0.0
        %1016 = vmatprep.subr.mxu0 0.0
        %1017 = vmatpush1.msra.mxu0 0.0
        %1018 = vmatprep.subr.mxu0 0.0
        %1019 = vmatpush1.msra.mxu0 0.0
        %1020 = vmatprep.subr.mxu0 0.0
        %1021 = vmatpush1.msra.mxu0 0.0
        %1022 = vmatprep.subr.mxu0 0.0
        %1023 = vmatpush1.msra.mxu0 0.0
        %1024 = vmatprep.subr.mxu0 0.0
        %1025 = vmatpush1.msra.mxu0 0.0
        %1026 = vmatprep.subr.mxu0 0.0
        %1027 = vmatpush1.msra.mxu0 0.0
        %1028 = vmatprep.subr.mxu0 0.0
        %1029 = vmatpush1.msra.mxu0 0.0
        %1030 = vmatprep.subr.mxu0 0.0
        %1031 = vmatpush1.msra.mxu0 0.0
        %1032 = vmatprep.subr.mxu0 0.0
        %1033 = vmatpush1.msra.mxu0 0.0
        %1034 = vmatprep.subr.mxu0 0.0
        %1035 = vmatpush1.msra.mxu0 0.0
        %1036 = vmatprep.subr.mxu0 0.0
        %1037 = vmatpush1.msra.mxu0 0.0
        %1038 = vmatprep.subr.mxu0 0.0
        %1039 = vmatpush1.msra.mxu0 0.0
        %1040 = vmatprep.subr.mxu0 0.0
        %1041 = vmatpush1.msra.mxu0 0.0
        %1042 = vmatprep.subr.mxu0 0.0
        %1043 = vmatpush1.msra.mxu0 0.0
        %1044 = vmatprep.subr.mxu0 0.0
        %1045 = vmatpush1.msra.mxu0 0.0
        %1046 = vmatprep.subr.mxu0 0.0
        %1047 = vmatpush1.msra.mxu0 0.0
        %1048 = vmatprep.subr.mxu0 0.0
        %1049 = vmatpush1.msra.mxu0 0.0
        %1050 = vmatprep.subr.mxu0 0.0
        %1051 = vmatpush1.msra.mxu0 0.0
        %1052 = vmatprep.subr.mxu0 0.0
        %1053 = vmatpush1.msra.mxu0 0.0
        %1054 = vmatprep.subr.mxu0 0.0
        %1055 = vmatpush1.msra.mxu0 0.0
        %1056 = vmatprep.mubr.f32.mxu0 0.0
        %1057 = vmatmul.mubr.f32.gmra.mrb[0].mxu0 %v986
        %v1058 = vpop.f32.mrb[0].mxu0
        %v1059 = vadd.f32 0.0, %v1058
        %v1060 = vpop.f32.mrb[0].mxu0
        %v1061 = vadd.f32 0.0, %v1060
        %1062 = vdwg.mxu0
        %v1063 = vadd.f32 %v958, %v1059
        %v1064 = vadd.f32 %v959, %v1061
        %v1065 = vld [vmem:[#allocation2] sm:$0xff]
        %v1066 = vld [vmem:[#allocation2 + $0x8] sm:$0xf]
        %s1067 = scalar_lea.vmem [#allocation3], 28
        %v1068 = vld [vmem:[%s1067] sm:$0xf]
        %v1071 = vcombine.high %v1065, %v1065
        %1072 = vrot.lane.b32.xlu0 %v1065, 95
        %v1073 = vpop.permute.xlu0 %1072
        %1074 = vrot.lane.b32.xlu0 %v1071, 95
        %v1075 = vpop.permute.xlu0 %1074
        %1076 = vrot.lane.b32.xlu0 %v1066, 95
        %v1077 = vpop.permute.xlu0 %1076
        %vm1078 = vcmask 777216
        %v1079 = vsel %vm1078, %v1073, %v1075
        %v1080 = vsel %vm1078, %v1075, %v1077
        %v1082 = vsel %vm386, %v1068, 0
        %v1084 = vsel %vm390, %v1079, 0
        %v1086 = vsel %vm390, %v1080, 0
        %1088 = vmatprep.subr.mxu0 %v1086
        %1089 = vmatpush1.msra.mxu0 %v1084
        %1090 = vmatprep.subr.mxu0 0.0
        %1091 = vmatpush1.msra.mxu0 0.0
        %1092 = vmatprep.subr.mxu0 0.0
        %1093 = vmatpush1.msra.mxu0 0.0
        %1094 = vmatprep.subr.mxu0 0.0
        %1095 = vmatpush1.msra.mxu0 0.0
        %1096 = vmatprep.subr.mxu0 0.0
        %1097 = vmatpush1.msra.mxu0 0.0
        %1098 = vmatprep.subr.mxu0 0.0
        %1099 = vmatpush1.msra.mxu0 0.0
        %1100 = vmatprep.subr.mxu0 0.0
        %1101 = vmatpush1.msra.mxu0 0.0
        %1102 = vmatprep.subr.mxu0 0.0
        %1103 = vmatpush1.msra.mxu0 0.0
        %1104 = vmatprep.subr.mxu0 0.0
        %1105 = vmatpush1.msra.mxu0 0.0
        %1106 = vmatprep.subr.mxu0 0.0
        %1107 = vmatpush1.msra.mxu0 0.0
        %1108 = vmatprep.subr.mxu0 0.0
        %1109 = vmatpush1.msra.mxu0 0.0
        %1110 = vmatprep.subr.mxu0 0.0
        %1111 = vmatpush1.msra.mxu0 0.0
        %1112 = vmatprep.subr.mxu0 0.0
        %1113 = vmatpush1.msra.mxu0 0.0
        %1114 = vmatprep.subr.mxu0 0.0
        %1115 = vmatpush1.msra.mxu0 0.0
        %1116 = vmatprep.subr.mxu0 0.0
        %1117 = vmatpush1.msra.mxu0 0.0
        %1118 = vmatprep.subr.mxu0 0.0
        %1119 = vmatpush1.msra.mxu0 0.0
        %1120 = vmatprep.subr.mxu0 0.0
        %1121 = vmatpush1.msra.mxu0 0.0
        %1122 = vmatprep.subr.mxu0 0.0
        %1123 = vmatpush1.msra.mxu0 0.0
        %1124 = vmatprep.subr.mxu0 0.0
        %1125 = vmatpush1.msra.mxu0 0.0
        %1126 = vmatprep.subr.mxu0 0.0
        %1127 = vmatpush1.msra.mxu0 0.0
        %1128 = vmatprep.subr.mxu0 0.0
        %1129 = vmatpush1.msra.mxu0 0.0
        %1130 = vmatprep.subr.mxu0 0.0
        %1131 = vmatpush1.msra.mxu0 0.0
        %1132 = vmatprep.subr.mxu0 0.0
        %1133 = vmatpush1.msra.mxu0 0.0
        %1134 = vmatprep.subr.mxu0 0.0
        %1135 = vmatpush1.msra.mxu0 0.0
        %1136 = vmatprep.subr.mxu0 0.0
        %1137 = vmatpush1.msra.mxu0 0.0
        %1138 = vmatprep.subr.mxu0 0.0
        %1139 = vmatpush1.msra.mxu0 0.0
        %1140 = vmatprep.subr.mxu0 0.0
        %1141 = vmatpush1.msra.mxu0 0.0
        %1142 = vmatprep.subr.mxu0 0.0
        %1143 = vmatpush1.msra.mxu0 0.0
        %1144 = vmatprep.subr.mxu0 0.0
        %1145 = vmatpush1.msra.mxu0 0.0
        %1146 = vmatprep.subr.mxu0 0.0
        %1147 = vmatpush1.msra.mxu0 0.0
        %1148 = vmatprep.subr.mxu0 0.0
        %1149 = vmatpush1.msra.mxu0 0.0
        %1150 = vmatprep.subr.mxu0 0.0
        %1151 = vmatpush1.msra.mxu0 0.0
        %1152 = vmatprep.mubr.f32.mxu0 0.0
        %1153 = vmatmul.mubr.f32.gmra.mrb[0].mxu0 %v1082
        %v1154 = vpop.f32.mrb[0].mxu0
        %v1155 = vadd.f32 0.0, %v1154
        %v1156 = vpop.f32.mrb[0].mxu0
        %v1157 = vadd.f32 0.0, %v1156
        %1158 = vdwg.mxu0
        %v1159 = vadd.f32 %v1063, %v1155
        %v1160 = vadd.f32 %v1064, %v1157
        %v1161 = vld [vmem:[#allocation2] sm:$0xff]
        %v1162 = vld [vmem:[#allocation2 + $0x8] sm:$0xf]
        %1163 = vrot.lane.b32.xlu0 %v550, 34
        %v1164 = vpop.permute.xlu0 %1163
        %v1165 = vrot.slane %v1164, 4
        %vm1166 = vcmask 277504
        %v1167 = vsel %vm1166, %v1165, %v1164
        %v1170 = vmul.f32 %v1161, %v1167
        %v1171 = vmul.f32 %v1162, %v1165
        %s1172 = scalar_lea.vmem [#allocation3], 32
        %v1173 = vld [vmem:[%s1172] sm:$0xf]
        %v1176 = vcombine.high %v1170, %v1170
        %1177 = vrot.lane.b32.xlu0 %v1170, 94
        %v1178 = vpop.permute.xlu0 %1177
        %1179 = vrot.lane.b32.xlu0 %v1176, 94
        %v1180 = vpop.permute.xlu0 %1179
        %1181 = vrot.lane.b32.xlu0 %v1171, 94
        %v1182 = vpop.permute.xlu0 %1181
        %vm1183 = vcmask 769024
        %v1184 = vsel %vm1183, %v1178, %v1180
        %v1185 = vsel %vm1183, %v1180, %v1182
        %v1187 = vsel %vm386, %v1173, 0
        %v1189 = vsel %vm390, %v1184, 0
        %v1191 = vsel %vm390, %v1185, 0
        %1193 = vmatprep.subr.mxu0 %v1191
        %1194 = vmatpush1.msra.mxu0 %v1189
        %1195 = vmatprep.subr.mxu0 0.0
        %1196 = vmatpush1.msra.mxu0 0.0
        %1197 = vmatprep.subr.mxu0 0.0
        %1198 = vmatpush1.msra.mxu0 0.0
        %1199 = vmatprep.subr.mxu0 0.0
        %1200 = vmatpush1.msra.mxu0 0.0
        %1201 = vmatprep.subr.mxu0 0.0
        %1202 = vmatpush1.msra.mxu0 0.0
        %1203 = vmatprep.subr.mxu0 0.0
        %1204 = vmatpush1.msra.mxu0 0.0
        %1205 = vmatprep.subr.mxu0 0.0
        %1206 = vmatpush1.msra.mxu0 0.0
        %1207 = vmatprep.subr.mxu0 0.0
        %1208 = vmatpush1.msra.mxu0 0.0
        %1209 = vmatprep.subr.mxu0 0.0
        %1210 = vmatpush1.msra.mxu0 0.0
        %1211 = vmatprep.subr.mxu0 0.0
        %1212 = vmatpush1.msra.mxu0 0.0
        %1213 = vmatprep.subr.mxu0 0.0
        %1214 = vmatpush1.msra.mxu0 0.0
        %1215 = vmatprep.subr.mxu0 0.0
        %1216 = vmatpush1.msra.mxu0 0.0
        %1217 = vmatprep.subr.mxu0 0.0
        %1218 = vmatpush1.msra.mxu0 0.0
        %1219 = vmatprep.subr.mxu0 0.0
        %1220 = vmatpush1.msra.mxu0 0.0
        %1221 = vmatprep.subr.mxu0 0.0
        %1222 = vmatpush1.msra.mxu0 0.0
        %1223 = vmatprep.subr.mxu0 0.0
        %1224 = vmatpush1.msra.mxu0 0.0
        %1225 = vmatprep.subr.mxu0 0.0
        %1226 = vmatpush1.msra.mxu0 0.0
        %1227 = vmatprep.subr.mxu0 0.0
        %1228 = vmatpush1.msra.mxu0 0.0
        %1229 = vmatprep.subr.mxu0 0.0
        %1230 = vmatpush1.msra.mxu0 0.0
        %1231 = vmatprep.subr.mxu0 0.0
        %1232 = vmatpush1.msra.mxu0 0.0
        %1233 = vmatprep.subr.mxu0 0.0
        %1234 = vmatpush1.msra.mxu0 0.0
        %1235 = vmatprep.subr.mxu0 0.0
        %1236 = vmatpush1.msra.mxu0 0.0
        %1237 = vmatprep.subr.mxu0 0.0
        %1238 = vmatpush1.msra.mxu0 0.0
        %1239 = vmatprep.subr.mxu0 0.0
        %1240 = vmatpush1.msra.mxu0 0.0
        %1241 = vmatprep.subr.mxu0 0.0
        %1242 = vmatpush1.msra.mxu0 0.0
        %1243 = vmatprep.subr.mxu0 0.0
        %1244 = vmatpush1.msra.mxu0 0.0
        %1245 = vmatprep.subr.mxu0 0.0
        %1246 = vmatpush1.msra.mxu0 0.0
        %1247 = vmatprep.subr.mxu0 0.0
        %1248 = vmatpush1.msra.mxu0 0.0
        %1249 = vmatprep.subr.mxu0 0.0
        %1250 = vmatpush1.msra.mxu0 0.0
        %1251 = vmatprep.subr.mxu0 0.0
        %1252 = vmatpush1.msra.mxu0 0.0
        %1253 = vmatprep.subr.mxu0 0.0
        %1254 = vmatpush1.msra.mxu0 0.0
        %1255 = vmatprep.subr.mxu0 0.0
        %1256 = vmatpush1.msra.mxu0 0.0
        %1257 = vmatprep.mubr.f32.mxu0 0.0
        %1258 = vmatmul.mubr.f32.gmra.mrb[0].mxu0 %v1187
        %v1259 = vpop.f32.mrb[0].mxu0
        %v1260 = vadd.f32 0.0, %v1259
        %v1261 = vpop.f32.mrb[0].mxu0
        %v1262 = vadd.f32 0.0, %v1261
        %1263 = vdwg.mxu0
        %v1264 = vadd.f32 %v1159, %v1260
        %v1265 = vadd.f32 %v1160, %v1262
        %v1266 = vld [vmem:[%s3] sm:$0xf]
        %1268 = vset.pattern.permute.xlu0 0
        %1269 = vperm.xlu0 %1268, %v1266
        %v1270 = vpop.permute.xlu0 %1269
        %v1272 = vmul.f32 %v1264, %v1270
        %v1273 = vmul.f32 %v1265, %v1270
        %v1274 = vld [vmem:[%s4] sm:$0xf]
        %1276 = vset.pattern.permute.xlu0 0
        %1277 = vperm.xlu0 %1276, %v1274
        %v1278 = vpop.permute.xlu0 %1277
        %v1280 = vadd.f32 %v1272, %v1278
        %v1281 = vadd.f32 %v1273, %v1278
        %v1282 = vmax.f32 %v1280, 0.0
        %v1283 = vmax.f32 %v1281, 0.0
        %v1286 = vcombine.low %v1282, %v1283
        %1287 = vrot.lane.b32.xlu0 %v1286, 17
        %v1288 = vpop.permute.xlu0 %1287
        %v1289 = vrot.slane %v1288, 4
        %v1290 = vsel %vm355, %v1289, %v1288
        %1293 = vst.msk [vmem:[#allocation2] sm:$0xff] %vm361, %v1290
        %1294 = vst.msk [vmem:[#allocation2 + $0x8] sm:$0xf] %vm346, %v1289
        %v1295 = vld [vmem:[#allocation2] sm:$0xff]
        %v1296 = vmul.f32 %v1295, %v367
        %v1297 = vld [vmem:[#allocation6] sm:$0xf]
        %v1298 = vld [vmem:[#allocation2 + $0x8] sm:$0xf]
        %s1299 = scalar_lea.vmem [#allocation6], 4
        %v1300 = vld [vmem:[%s1299] sm:$0xf]
        %v1303 = vcombine.high %v1295, %v1295
        %1304 = vrot.lane.b32.xlu0 %v1295, 127
        %v1305 = vpop.permute.xlu0 %1304
        %1306 = vrot.lane.b32.xlu0 %v1303, 127
        %v1307 = vpop.permute.xlu0 %1306
        %1308 = vrot.lane.b32.xlu0 %v1298, 127
        %v1309 = vpop.permute.xlu0 %1308
        %v1310 = vsel %vm383, %v1305, %v1307
        %v1311 = vsel %vm383, %v1307, %v1309
        %v1313 = vsel %vm386, %v1300, 0
        %v1315 = vsel %vm390, %v1310, 0
        %v1317 = vsel %vm390, %v1311, 0
        %1319 = vmatprep.subr.mxu0 %v1317
        %1320 = vmatpush1.msra.mxu0 %v1315
        %1321 = vmatprep.subr.mxu0 0.0
        %1322 = vmatpush1.msra.mxu0 0.0
        %1323 = vmatprep.subr.mxu0 0.0
        %1324 = vmatpush1.msra.mxu0 0.0
        %1325 = vmatprep.subr.mxu0 0.0
        %1326 = vmatpush1.msra.mxu0 0.0
        %1327 = vmatprep.subr.mxu0 0.0
        %1328 = vmatpush1.msra.mxu0 0.0
        %1329 = vmatprep.subr.mxu0 0.0
        %1330 = vmatpush1.msra.mxu0 0.0
        %1331 = vmatprep.subr.mxu0 0.0
        %1332 = vmatpush1.msra.mxu0 0.0
        %1333 = vmatprep.subr.mxu0 0.0
        %1334 = vmatpush1.msra.mxu0 0.0
        %1335 = vmatprep.subr.mxu0 0.0
        %1336 = vmatpush1.msra.mxu0 0.0
        %1337 = vmatprep.subr.mxu0 0.0
        %1338 = vmatpush1.msra.mxu0 0.0
        %1339 = vmatprep.subr.mxu0 0.0
        %1340 = vmatpush1.msra.mxu0 0.0
        %1341 = vmatprep.subr.mxu0 0.0
        %1342 = vmatpush1.msra.mxu0 0.0
        %1343 = vmatprep.subr.mxu0 0.0
        %1344 = vmatpush1.msra.mxu0 0.0
        %1345 = vmatprep.subr.mxu0 0.0
        %1346 = vmatpush1.msra.mxu0 0.0
        %1347 = vmatprep.subr.mxu0 0.0
        %1348 = vmatpush1.msra.mxu0 0.0
        %1349 = vmatprep.subr.mxu0 0.0
        %1350 = vmatpush1.msra.mxu0 0.0
        %1351 = vmatprep.subr.mxu0 0.0
        %1352 = vmatpush1.msra.mxu0 0.0
        %1353 = vmatprep.subr.mxu0 0.0
        %1354 = vmatpush1.msra.mxu0 0.0
        %1355 = vmatprep.subr.mxu0 0.0
        %1356 = vmatpush1.msra.mxu0 0.0
        %1357 = vmatprep.subr.mxu0 0.0
        %1358 = vmatpush1.msra.mxu0 0.0
        %1359 = vmatprep.subr.mxu0 0.0
        %1360 = vmatpush1.msra.mxu0 0.0
        %1361 = vmatprep.subr.mxu0 0.0
        %1362 = vmatpush1.msra.mxu0 0.0
        %1363 = vmatprep.subr.mxu0 0.0
        %1364 = vmatpush1.msra.mxu0 0.0
        %1365 = vmatprep.subr.mxu0 0.0
        %1366 = vmatpush1.msra.mxu0 0.0
        %1367 = vmatprep.subr.mxu0 0.0
        %1368 = vmatpush1.msra.mxu0 0.0
        %1369 = vmatprep.subr.mxu0 0.0
        %1370 = vmatpush1.msra.mxu0 0.0
        %1371 = vmatprep.subr.mxu0 0.0
        %1372 = vmatpush1.msra.mxu0 0.0
        %1373 = vmatprep.subr.mxu0 0.0
        %1374 = vmatpush1.msra.mxu0 0.0
        %1375 = vmatprep.subr.mxu0 0.0
        %1376 = vmatpush1.msra.mxu0 0.0
        %1377 = vmatprep.subr.mxu0 0.0
        %1378 = vmatpush1.msra.mxu0 0.0
        %1379 = vmatprep.subr.mxu0 0.0
        %1380 = vmatpush1.msra.mxu0 0.0
        %1381 = vmatprep.subr.mxu0 0.0
        %1382 = vmatpush1.msra.mxu0 0.0
        %1383 = vmatprep.mubr.f32.mxu0 0.0
        %1384 = vmatmul.mubr.f32.gmra.mrb[0].mxu0 %v1313
        %v1385 = vpop.f32.mrb[0].mxu0
        %v1386 = vadd.f32 0.0, %v1385
        %v1387 = vpop.f32.mrb[0].mxu0
        %v1388 = vadd.f32 0.0, %v1387
        %1389 = vdwg.mxu0
        %v1391 = vcombine.high %v1296, %v1296
        %v1393 = vsel %vm386, %v1297, 0
        %v1395 = vsel %vm390, %v1296, 0
        %v1397 = vsel %vm390, %v1391, 0
        %1399 = vmatprep.subr.mxu0 %v1397
        %1400 = vmatpush1.msra.mxu0 %v1395
        %1401 = vmatprep.subr.mxu0 0.0
        %1402 = vmatpush1.msra.mxu0 0.0
        %1403 = vmatprep.subr.mxu0 0.0
        %1404 = vmatpush1.msra.mxu0 0.0
        %1405 = vmatprep.subr.mxu0 0.0
        %1406 = vmatpush1.msra.mxu0 0.0
        %1407 = vmatprep.subr.mxu0 0.0
        %1408 = vmatpush1.msra.mxu0 0.0
        %1409 = vmatprep.subr.mxu0 0.0
        %1410 = vmatpush1.msra.mxu0 0.0
        %1411 = vmatprep.subr.mxu0 0.0
        %1412 = vmatpush1.msra.mxu0 0.0
        %1413 = vmatprep.subr.mxu0 0.0
        %1414 = vmatpush1.msra.mxu0 0.0
        %1415 = vmatprep.subr.mxu0 0.0
        %1416 = vmatpush1.msra.mxu0 0.0
        %1417 = vmatprep.subr.mxu0 0.0
        %1418 = vmatpush1.msra.mxu0 0.0
        %1419 = vmatprep.subr.mxu0 0.0
        %1420 = vmatpush1.msra.mxu0 0.0
        %1421 = vmatprep.subr.mxu0 0.0
        %1422 = vmatpush1.msra.mxu0 0.0
        %1423 = vmatprep.subr.mxu0 0.0
        %1424 = vmatpush1.msra.mxu0 0.0
        %1425 = vmatprep.subr.mxu0 0.0
        %1426 = vmatpush1.msra.mxu0 0.0
        %1427 = vmatprep.subr.mxu0 0.0
        %1428 = vmatpush1.msra.mxu0 0.0
        %1429 = vmatprep.subr.mxu0 0.0
        %1430 = vmatpush1.msra.mxu0 0.0
        %1431 = vmatprep.subr.mxu0 0.0
        %1432 = vmatpush1.msra.mxu0 0.0
        %1433 = vmatprep.subr.mxu0 0.0
        %1434 = vmatpush1.msra.mxu0 0.0
        %1435 = vmatprep.subr.mxu0 0.0
        %1436 = vmatpush1.msra.mxu0 0.0
        %1437 = vmatprep.subr.mxu0 0.0
        %1438 = vmatpush1.msra.mxu0 0.0
        %1439 = vmatprep.subr.mxu0 0.0
        %1440 = vmatpush1.msra.mxu0 0.0
        %1441 = vmatprep.subr.mxu0 0.0
        %1442 = vmatpush1.msra.mxu0 0.0
        %1443 = vmatprep.subr.mxu0 0.0
        %1444 = vmatpush1.msra.mxu0 0.0
        %1445 = vmatprep.subr.mxu0 0.0
        %1446 = vmatpush1.msra.mxu0 0.0
        %1447 = vmatprep.subr.mxu0 0.0
        %1448 = vmatpush1.msra.mxu0 0.0
        %1449 = vmatprep.subr.mxu0 0.0
        %1450 = vmatpush1.msra.mxu0 0.0
        %1451 = vmatprep.subr.mxu0 0.0
        %1452 = vmatpush1.msra.mxu0 0.0
        %1453 = vmatprep.subr.mxu0 0.0
        %1454 = vmatpush1.msra.mxu0 0.0
        %1455 = vmatprep.subr.mxu0 0.0
        %1456 = vmatpush1.msra.mxu0 0.0
        %1457 = vmatprep.subr.mxu0 0.0
        %1458 = vmatpush1.msra.mxu0 0.0
        %1459 = vmatprep.subr.mxu0 0.0
        %1460 = vmatpush1.msra.mxu0 0.0
        %1461 = vmatprep.subr.mxu0 0.0
        %1462 = vmatpush1.msra.mxu0 0.0
        %1463 = vmatprep.mubr.f32.mxu0 0.0
        %1464 = vmatmul.mubr.f32.gmra.mrb[0].mxu0 %v1393
        %v1465 = vpop.f32.mrb[0].mxu0
        %v1466 = vadd.f32 %v1386, %v1465
        %v1467 = vpop.f32.mrb[0].mxu0
        %v1468 = vadd.f32 %v1388, %v1467
        %1469 = vdwg.mxu0
        %v1470 = vld [vmem:[#allocation2] sm:$0xff]
        %v1471 = vld [vmem:[#allocation2 + $0x8] sm:$0xf]
        %v1472 = vmul.f32 %v1470, %v555
        %v1473 = vmul.f32 %v1471, %v553
        %s1474 = scalar_lea.vmem [#allocation6], 8
        %v1475 = vld [vmem:[%s1474] sm:$0xf]
        %v1478 = vcombine.high %v1472, %v1472
        %1479 = vrot.lane.b32.xlu0 %v1472, 126
        %v1480 = vpop.permute.xlu0 %1479
        %1481 = vrot.lane.b32.xlu0 %v1478, 126
        %v1482 = vpop.permute.xlu0 %1481
        %1483 = vrot.lane.b32.xlu0 %v1473, 126
        %v1484 = vpop.permute.xlu0 %1483
        %v1485 = vsel %vm571, %v1480, %v1482
        %v1486 = vsel %vm571, %v1482, %v1484
        %v1488 = vsel %vm386, %v1475, 0
        %v1490 = vsel %vm390, %v1485, 0
        %v1492 = vsel %vm390, %v1486, 0
        %1494 = vmatprep.subr.mxu0 %v1492
        %1495 = vmatpush1.msra.mxu0 %v1490
        %1496 = vmatprep.subr.mxu0 0.0
        %1497 = vmatpush1.msra.mxu0 0.0
        %1498 = vmatprep.subr.mxu0 0.0
        %1499 = vmatpush1.msra.mxu0 0.0
        %1500 = vmatprep.subr.mxu0 0.0
        %1501 = vmatpush1.msra.mxu0 0.0
        %1502 = vmatprep.subr.mxu0 0.0
        %1503 = vmatpush1.msra.mxu0 0.0
        %1504 = vmatprep.subr.mxu0 0.0
        %1505 = vmatpush1.msra.mxu0 0.0
        %1506 = vmatprep.subr.mxu0 0.0
        %1507 = vmatpush1.msra.mxu0 0.0
        %1508 = vmatprep.subr.mxu0 0.0
        %1509 = vmatpush1.msra.mxu0 0.0
        %1510 = vmatprep.subr.mxu0 0.0
        %1511 = vmatpush1.msra.mxu0 0.0
        %1512 = vmatprep.subr.mxu0 0.0
        %1513 = vmatpush1.msra.mxu0 0.0
        %1514 = vmatprep.subr.mxu0 0.0
        %1515 = vmatpush1.msra.mxu0 0.0
        %1516 = vmatprep.subr.mxu0 0.0
        %1517 = vmatpush1.msra.mxu0 0.0
        %1518 = vmatprep.subr.mxu0 0.0
        %1519 = vmatpush1.msra.mxu0 0.0
        %1520 = vmatprep.subr.mxu0 0.0
        %1521 = vmatpush1.msra.mxu0 0.0
        %1522 = vmatprep.subr.mxu0 0.0
        %1523 = vmatpush1.msra.mxu0 0.0
        %1524 = vmatprep.subr.mxu0 0.0
        %1525 = vmatpush1.msra.mxu0 0.0
        %1526 = vmatprep.subr.mxu0 0.0
        %1527 = vmatpush1.msra.mxu0 0.0
        %1528 = vmatprep.subr.mxu0 0.0
        %1529 = vmatpush1.msra.mxu0 0.0
        %1530 = vmatprep.subr.mxu0 0.0
        %1531 = vmatpush1.msra.mxu0 0.0
        %1532 = vmatprep.subr.mxu0 0.0
        %1533 = vmatpush1.msra.mxu0 0.0
        %1534 = vmatprep.subr.mxu0 0.0
        %1535 = vmatpush1.msra.mxu0 0.0
        %1536 = vmatprep.subr.mxu0 0.0
        %1537 = vmatpush1.msra.mxu0 0.0
        %1538 = vmatprep.subr.mxu0 0.0
        %1539 = vmatpush1.msra.mxu0 0.0
        %1540 = vmatprep.subr.mxu0 0.0
        %1541 = vmatpush1.msra.mxu0 0.0
        %1542 = vmatprep.subr.mxu0 0.0
        %1543 = vmatpush1.msra.mxu0 0.0
        %1544 = vmatprep.subr.mxu0 0.0
        %1545 = vmatpush1.msra.mxu0 0.0
        %1546 = vmatprep.subr.mxu0 0.0
        %1547 = vmatpush1.msra.mxu0 0.0
        %1548 = vmatprep.subr.mxu0 0.0
        %1549 = vmatpush1.msra.mxu0 0.0
        %1550 = vmatprep.subr.mxu0 0.0
        %1551 = vmatpush1.msra.mxu0 0.0
        %1552 = vmatprep.subr.mxu0 0.0
        %1553 = vmatpush1.msra.mxu0 0.0
        %1554 = vmatprep.subr.mxu0 0.0
        %1555 = vmatpush1.msra.mxu0 0.0
        %1556 = vmatprep.subr.mxu0 0.0
        %1557 = vmatpush1.msra.mxu0 0.0
        %1558 = vmatprep.mubr.f32.mxu0 0.0
        %1559 = vmatmul.mubr.f32.gmra.mrb[0].mxu0 %v1488
        %v1560 = vpop.f32.mrb[0].mxu0
        %v1561 = vadd.f32 0.0, %v1560
        %v1562 = vpop.f32.mrb[0].mxu0
        %v1563 = vadd.f32 0.0, %v1562
        %1564 = vdwg.mxu0
        %v1565 = vadd.f32 %v1466, %v1561
        %v1566 = vadd.f32 %v1468, %v1563
        %v1567 = vld [vmem:[#allocation2] sm:$0xff]
        %v1568 = vld [vmem:[#allocation2 + $0x8] sm:$0xf]
        %v1569 = vmul.f32 %v1567, %v660
        %v1570 = vmul.f32 %v1568, %v658
        %s1571 = scalar_lea.vmem [#allocation6], 12
        %v1572 = vld [vmem:[%s1571] sm:$0xf]
        %v1575 = vcombine.high %v1569, %v1569
        %1576 = vrot.lane.b32.xlu0 %v1569, 112
        %v1577 = vpop.permute.xlu0 %1576
        %1578 = vrot.lane.b32.xlu0 %v1575, 112
        %v1579 = vpop.permute.xlu0 %1578
        %1580 = vrot.lane.b32.xlu0 %v1570, 112
        %v1581 = vpop.permute.xlu0 %1580
        %v1582 = vsel %vm676, %v1577, %v1579
        %v1583 = vsel %vm676, %v1579, %v1581
        %v1585 = vsel %vm386, %v1572, 0
        %v1587 = vsel %vm390, %v1582, 0
        %v1589 = vsel %vm390, %v1583, 0
        %1591 = vmatprep.subr.mxu0 %v1589
        %1592 = vmatpush1.msra.mxu0 %v1587
        %1593 = vmatprep.subr.mxu0 0.0
        %1594 = vmatpush1.msra.mxu0 0.0
        %1595 = vmatprep.subr.mxu0 0.0
        %1596 = vmatpush1.msra.mxu0 0.0
        %1597 = vmatprep.subr.mxu0 0.0
        %1598 = vmatpush1.msra.mxu0 0.0
        %1599 = vmatprep.subr.mxu0 0.0
        %1600 = vmatpush1.msra.mxu0 0.0
        %1601 = vmatprep.subr.mxu0 0.0
        %1602 = vmatpush1.msra.mxu0 0.0
        %1603 = vmatprep.subr.mxu0 0.0
        %1604 = vmatpush1.msra.mxu0 0.0
        %1605 = vmatprep.subr.mxu0 0.0
        %1606 = vmatpush1.msra.mxu0 0.0
        %1607 = vmatprep.subr.mxu0 0.0
        %1608 = vmatpush1.msra.mxu0 0.0
        %1609 = vmatprep.subr.mxu0 0.0
        %1610 = vmatpush1.msra.mxu0 0.0
        %1611 = vmatprep.subr.mxu0 0.0
        %1612 = vmatpush1.msra.mxu0 0.0
        %1613 = vmatprep.subr.mxu0 0.0
        %1614 = vmatpush1.msra.mxu0 0.0
        %1615 = vmatprep.subr.mxu0 0.0
        %1616 = vmatpush1.msra.mxu0 0.0
        %1617 = vmatprep.subr.mxu0 0.0
        %1618 = vmatpush1.msra.mxu0 0.0
        %1619 = vmatprep.subr.mxu0 0.0
        %1620 = vmatpush1.msra.mxu0 0.0
        %1621 = vmatprep.subr.mxu0 0.0
        %1622 = vmatpush1.msra.mxu0 0.0
        %1623 = vmatprep.subr.mxu0 0.0
        %1624 = vmatpush1.msra.mxu0 0.0
        %1625 = vmatprep.subr.mxu0 0.0
        %1626 = vmatpush1.msra.mxu0 0.0
        %1627 = vmatprep.subr.mxu0 0.0
        %1628 = vmatpush1.msra.mxu0 0.0
        %1629 = vmatprep.subr.mxu0 0.0
        %1630 = vmatpush1.msra.mxu0 0.0
        %1631 = vmatprep.subr.mxu0 0.0
        %1632 = vmatpush1.msra.mxu0 0.0
        %1633 = vmatprep.subr.mxu0 0.0
        %1634 = vmatpush1.msra.mxu0 0.0
        %1635 = vmatprep.subr.mxu0 0.0
        %1636 = vmatpush1.msra.mxu0 0.0
        %1637 = vmatprep.subr.mxu0 0.0
        %1638 = vmatpush1.msra.mxu0 0.0
        %1639 = vmatprep.subr.mxu0 0.0
        %1640 = vmatpush1.msra.mxu0 0.0
        %1641 = vmatprep.subr.mxu0 0.0
        %1642 = vmatpush1.msra.mxu0 0.0
        %1643 = vmatprep.subr.mxu0 0.0
        %1644 = vmatpush1.msra.mxu0 0.0
        %1645 = vmatprep.subr.mxu0 0.0
        %1646 = vmatpush1.msra.mxu0 0.0
        %1647 = vmatprep.subr.mxu0 0.0
        %1648 = vmatpush1.msra.mxu0 0.0
        %1649 = vmatprep.subr.mxu0 0.0
        %1650 = vmatpush1.msra.mxu0 0.0
        %1651 = vmatprep.subr.mxu0 0.0
        %1652 = vmatpush1.msra.mxu0 0.0
        %1653 = vmatprep.subr.mxu0 0.0
        %1654 = vmatpush1.msra.mxu0 0.0
        %1655 = vmatprep.mubr.f32.mxu0 0.0
        %1656 = vmatmul.mubr.f32.gmra.mrb[0].mxu0 %v1585
        %v1657 = vpop.f32.mrb[0].mxu0
        %v1658 = vadd.f32 0.0, %v1657
        %v1659 = vpop.f32.mrb[0].mxu0
        %v1660 = vadd.f32 0.0, %v1659
        %1661 = vdwg.mxu0
        %v1662 = vadd.f32 %v1565, %v1658
        %v1663 = vadd.f32 %v1566, %v1660
        %v1664 = vld [vmem:[#allocation2] sm:$0xff]
        %v1665 = vld [vmem:[#allocation2 + $0x8] sm:$0xf]
        %s1666 = scalar_lea.vmem [#allocation6], 16
        %v1667 = vld [vmem:[%s1666] sm:$0xf]
        %v1670 = vcombine.high %v1664, %v1664
        %1671 = vrot.lane.b32.xlu0 %v1664, 111
        %v1672 = vpop.permute.xlu0 %1671
        %1673 = vrot.lane.b32.xlu0 %v1670, 111
        %v1674 = vpop.permute.xlu0 %1673
        %1675 = vrot.lane.b32.xlu0 %v1665, 111
        %v1676 = vpop.permute.xlu0 %1675
        %v1677 = vsel %vm772, %v1672, %v1674
        %v1678 = vsel %vm772, %v1674, %v1676
        %v1680 = vsel %vm386, %v1667, 0
        %v1682 = vsel %vm390, %v1677, 0
        %v1684 = vsel %vm390, %v1678, 0
        %1686 = vmatprep.subr.mxu0 %v1684
        %1687 = vmatpush1.msra.mxu0 %v1682
        %1688 = vmatprep.subr.mxu0 0.0
        %1689 = vmatpush1.msra.mxu0 0.0
        %1690 = vmatprep.subr.mxu0 0.0
        %1691 = vmatpush1.msra.mxu0 0.0
        %1692 = vmatprep.subr.mxu0 0.0
        %1693 = vmatpush1.msra.mxu0 0.0
        %1694 = vmatprep.subr.mxu0 0.0
        %1695 = vmatpush1.msra.mxu0 0.0
        %1696 = vmatprep.subr.mxu0 0.0
        %1697 = vmatpush1.msra.mxu0 0.0
        %1698 = vmatprep.subr.mxu0 0.0
        %1699 = vmatpush1.msra.mxu0 0.0
        %1700 = vmatprep.subr.mxu0 0.0
        %1701 = vmatpush1.msra.mxu0 0.0
        %1702 = vmatprep.subr.mxu0 0.0
        %1703 = vmatpush1.msra.mxu0 0.0
        %1704 = vmatprep.subr.mxu0 0.0
        %1705 = vmatpush1.msra.mxu0 0.0
        %1706 = vmatprep.subr.mxu0 0.0
        %1707 = vmatpush1.msra.mxu0 0.0
        %1708 = vmatprep.subr.mxu0 0.0
        %1709 = vmatpush1.msra.mxu0 0.0
        %1710 = vmatprep.subr.mxu0 0.0
        %1711 = vmatpush1.msra.mxu0 0.0
        %1712 = vmatprep.subr.mxu0 0.0
        %1713 = vmatpush1.msra.mxu0 0.0
        %1714 = vmatprep.subr.mxu0 0.0
        %1715 = vmatpush1.msra.mxu0 0.0
        %1716 = vmatprep.subr.mxu0 0.0
        %1717 = vmatpush1.msra.mxu0 0.0
        %1718 = vmatprep.subr.mxu0 0.0
        %1719 = vmatpush1.msra.mxu0 0.0
        %1720 = vmatprep.subr.mxu0 0.0
        %1721 = vmatpush1.msra.mxu0 0.0
        %1722 = vmatprep.subr.mxu0 0.0
        %1723 = vmatpush1.msra.mxu0 0.0
        %1724 = vmatprep.subr.mxu0 0.0
        %1725 = vmatpush1.msra.mxu0 0.0
        %1726 = vmatprep.subr.mxu0 0.0
        %1727 = vmatpush1.msra.mxu0 0.0
        %1728 = vmatprep.subr.mxu0 0.0
        %1729 = vmatpush1.msra.mxu0 0.0
        %1730 = vmatprep.subr.mxu0 0.0
        %1731 = vmatpush1.msra.mxu0 0.0
        %1732 = vmatprep.subr.mxu0 0.0
        %1733 = vmatpush1.msra.mxu0 0.0
        %1734 = vmatprep.subr.mxu0 0.0
        %1735 = vmatpush1.msra.mxu0 0.0
        %1736 = vmatprep.subr.mxu0 0.0
        %1737 = vmatpush1.msra.mxu0 0.0
        %1738 = vmatprep.subr.mxu0 0.0
        %1739 = vmatpush1.msra.mxu0 0.0
        %1740 = vmatprep.subr.mxu0 0.0
        %1741 = vmatpush1.msra.mxu0 0.0
        %1742 = vmatprep.subr.mxu0 0.0
        %1743 = vmatpush1.msra.mxu0 0.0
        %1744 = vmatprep.subr.mxu0 0.0
        %1745 = vmatpush1.msra.mxu0 0.0
        %1746 = vmatprep.subr.mxu0 0.0
        %1747 = vmatpush1.msra.mxu0 0.0
        %1748 = vmatprep.subr.mxu0 0.0
        %1749 = vmatpush1.msra.mxu0 0.0
        %1750 = vmatprep.mubr.f32.mxu0 0.0
        %1751 = vmatmul.mubr.f32.gmra.mrb[0].mxu0 %v1680
        %v1752 = vpop.f32.mrb[0].mxu0
        %v1753 = vadd.f32 0.0, %v1752
        %v1754 = vpop.f32.mrb[0].mxu0
        %v1755 = vadd.f32 0.0, %v1754
        %1756 = vdwg.mxu0
        %v1757 = vadd.f32 %v1662, %v1753
        %v1758 = vadd.f32 %v1663, %v1755
        %v1759 = vld [vmem:[#allocation2] sm:$0xff]
        %v1760 = vld [vmem:[#allocation2 + $0x8] sm:$0xf]
        %v1761 = vmul.f32 %v1759, %v861
        %v1762 = vmul.f32 %v1760, %v859
        %s1763 = scalar_lea.vmem [#allocation6], 20
        %v1764 = vld [vmem:[%s1763] sm:$0xf]
        %v1767 = vcombine.high %v1761, %v1761
        %1768 = vrot.lane.b32.xlu0 %v1761, 110
        %v1769 = vpop.permute.xlu0 %1768
        %1770 = vrot.lane.b32.xlu0 %v1767, 110
        %v1771 = vpop.permute.xlu0 %1770
        %1772 = vrot.lane.b32.xlu0 %v1762, 110
        %v1773 = vpop.permute.xlu0 %1772
        %v1774 = vsel %vm877, %v1769, %v1771
        %v1775 = vsel %vm877, %v1771, %v1773
        %v1777 = vsel %vm386, %v1764, 0
        %v1779 = vsel %vm390, %v1774, 0
        %v1781 = vsel %vm390, %v1775, 0
        %1783 = vmatprep.subr.mxu0 %v1781
        %1784 = vmatpush1.msra.mxu0 %v1779
        %1785 = vmatprep.subr.mxu0 0.0
        %1786 = vmatpush1.msra.mxu0 0.0
        %1787 = vmatprep.subr.mxu0 0.0
        %1788 = vmatpush1.msra.mxu0 0.0
        %1789 = vmatprep.subr.mxu0 0.0
        %1790 = vmatpush1.msra.mxu0 0.0
        %1791 = vmatprep.subr.mxu0 0.0
        %1792 = vmatpush1.msra.mxu0 0.0
        %1793 = vmatprep.subr.mxu0 0.0
        %1794 = vmatpush1.msra.mxu0 0.0
        %1795 = vmatprep.subr.mxu0 0.0
        %1796 = vmatpush1.msra.mxu0 0.0
        %1797 = vmatprep.subr.mxu0 0.0
        %1798 = vmatpush1.msra.mxu0 0.0
        %1799 = vmatprep.subr.mxu0 0.0
        %1800 = vmatpush1.msra.mxu0 0.0
        %1801 = vmatprep.subr.mxu0 0.0
        %1802 = vmatpush1.msra.mxu0 0.0
        %1803 = vmatprep.subr.mxu0 0.0
        %1804 = vmatpush1.msra.mxu0 0.0
        %1805 = vmatprep.subr.mxu0 0.0
        %1806 = vmatpush1.msra.mxu0 0.0
        %1807 = vmatprep.subr.mxu0 0.0
        %1808 = vmatpush1.msra.mxu0 0.0
        %1809 = vmatprep.subr.mxu0 0.0
        %1810 = vmatpush1.msra.mxu0 0.0
        %1811 = vmatprep.subr.mxu0 0.0
        %1812 = vmatpush1.msra.mxu0 0.0
        %1813 = vmatprep.subr.mxu0 0.0
        %1814 = vmatpush1.msra.mxu0 0.0
        %1815 = vmatprep.subr.mxu0 0.0
        %1816 = vmatpush1.msra.mxu0 0.0
        %1817 = vmatprep.subr.mxu0 0.0
        %1818 = vmatpush1.msra.mxu0 0.0
        %1819 = vmatprep.subr.mxu0 0.0
        %1820 = vmatpush1.msra.mxu0 0.0
        %1821 = vmatprep.subr.mxu0 0.0
        %1822 = vmatpush1.msra.mxu0 0.0
        %1823 = vmatprep.subr.mxu0 0.0
        %1824 = vmatpush1.msra.mxu0 0.0
        %1825 = vmatprep.subr.mxu0 0.0
        %1826 = vmatpush1.msra.mxu0 0.0
        %1827 = vmatprep.subr.mxu0 0.0
        %1828 = vmatpush1.msra.mxu0 0.0
        %1829 = vmatprep.subr.mxu0 0.0
        %1830 = vmatpush1.msra.mxu0 0.0
        %1831 = vmatprep.subr.mxu0 0.0
        %1832 = vmatpush1.msra.mxu0 0.0
        %1833 = vmatprep.subr.mxu0 0.0
        %1834 = vmatpush1.msra.mxu0 0.0
        %1835 = vmatprep.subr.mxu0 0.0
        %1836 = vmatpush1.msra.mxu0 0.0
        %1837 = vmatprep.subr.mxu0 0.0
        %1838 = vmatpush1.msra.mxu0 0.0
        %1839 = vmatprep.subr.mxu0 0.0
        %1840 = vmatpush1.msra.mxu0 0.0
        %1841 = vmatprep.subr.mxu0 0.0
        %1842 = vmatpush1.msra.mxu0 0.0
        %1843 = vmatprep.subr.mxu0 0.0
        %1844 = vmatpush1.msra.mxu0 0.0
        %1845 = vmatprep.subr.mxu0 0.0
        %1846 = vmatpush1.msra.mxu0 0.0
        %1847 = vmatprep.mubr.f32.mxu0 0.0
        %1848 = vmatmul.mubr.f32.gmra.mrb[0].mxu0 %v1777
        %v1849 = vpop.f32.mrb[0].mxu0
        %v1850 = vadd.f32 0.0, %v1849
        %v1851 = vpop.f32.mrb[0].mxu0
        %v1852 = vadd.f32 0.0, %v1851
        %1853 = vdwg.mxu0
        %v1854 = vadd.f32 %v1757, %v1850
        %v1855 = vadd.f32 %v1758, %v1852
        %v1856 = vld [vmem:[#allocation2] sm:$0xff]
        %v1857 = vld [vmem:[#allocation2 + $0x8] sm:$0xf]
        %v1858 = vmul.f32 %v1856, %v966
        %v1859 = vmul.f32 %v1857, %v964
        %s1860 = scalar_lea.vmem [#allocation6], 24
        %v1861 = vld [vmem:[%s1860] sm:$0xf]
        %v1864 = vcombine.high %v1858, %v1858
        %1865 = vrot.lane.b32.xlu0 %v1858, 96
        %v1866 = vpop.permute.xlu0 %1865
        %1867 = vrot.lane.b32.xlu0 %v1864, 96
        %v1868 = vpop.permute.xlu0 %1867
        %1869 = vrot.lane.b32.xlu0 %v1859, 96
        %v1870 = vpop.permute.xlu0 %1869
        %v1871 = vsel %vm982, %v1866, %v1868
        %v1872 = vsel %vm982, %v1868, %v1870
        %v1874 = vsel %vm386, %v1861, 0
        %v1876 = vsel %vm390, %v1871, 0
        %v1878 = vsel %vm390, %v1872, 0
        %1880 = vmatprep.subr.mxu0 %v1878
        %1881 = vmatpush1.msra.mxu0 %v1876
        %1882 = vmatprep.subr.mxu0 0.0
        %1883 = vmatpush1.msra.mxu0 0.0
        %1884 = vmatprep.subr.mxu0 0.0
        %1885 = vmatpush1.msra.mxu0 0.0
        %1886 = vmatprep.subr.mxu0 0.0
        %1887 = vmatpush1.msra.mxu0 0.0
        %1888 = vmatprep.subr.mxu0 0.0
        %1889 = vmatpush1.msra.mxu0 0.0
        %1890 = vmatprep.subr.mxu0 0.0
        %1891 = vmatpush1.msra.mxu0 0.0
        %1892 = vmatprep.subr.mxu0 0.0
        %1893 = vmatpush1.msra.mxu0 0.0
        %1894 = vmatprep.subr.mxu0 0.0
        %1895 = vmatpush1.msra.mxu0 0.0
        %1896 = vmatprep.subr.mxu0 0.0
        %1897 = vmatpush1.msra.mxu0 0.0
        %1898 = vmatprep.subr.mxu0 0.0
        %1899 = vmatpush1.msra.mxu0 0.0
        %1900 = vmatprep.subr.mxu0 0.0
        %1901 = vmatpush1.msra.mxu0 0.0
        %1902 = vmatprep.subr.mxu0 0.0
        %1903 = vmatpush1.msra.mxu0 0.0
        %1904 = vmatprep.subr.mxu0 0.0
        %1905 = vmatpush1.msra.mxu0 0.0
        %1906 = vmatprep.subr.mxu0 0.0
        %1907 = vmatpush1.msra.mxu0 0.0
        %1908 = vmatprep.subr.mxu0 0.0
        %1909 = vmatpush1.msra.mxu0 0.0
        %1910 = vmatprep.subr.mxu0 0.0
        %1911 = vmatpush1.msra.mxu0 0.0
        %1912 = vmatprep.subr.mxu0 0.0
        %1913 = vmatpush1.msra.mxu0 0.0
        %1914 = vmatprep.subr.mxu0 0.0
        %1915 = vmatpush1.msra.mxu0 0.0
        %1916 = vmatprep.subr.mxu0 0.0
        %1917 = vmatpush1.msra.mxu0 0.0
        %1918 = vmatprep.subr.mxu0 0.0
        %1919 = vmatpush1.msra.mxu0 0.0
        %1920 = vmatprep.subr.mxu0 0.0
        %1921 = vmatpush1.msra.mxu0 0.0
        %1922 = vmatprep.subr.mxu0 0.0
        %1923 = vmatpush1.msra.mxu0 0.0
        %1924 = vmatprep.subr.mxu0 0.0
        %1925 = vmatpush1.msra.mxu0 0.0
        %1926 = vmatprep.subr.mxu0 0.0
        %1927 = vmatpush1.msra.mxu0 0.0
        %1928 = vmatprep.subr.mxu0 0.0
        %1929 = vmatpush1.msra.mxu0 0.0
        %1930 = vmatprep.subr.mxu0 0.0
        %1931 = vmatpush1.msra.mxu0 0.0
        %1932 = vmatprep.subr.mxu0 0.0
        %1933 = vmatpush1.msra.mxu0 0.0
        %1934 = vmatprep.subr.mxu0 0.0
        %1935 = vmatpush1.msra.mxu0 0.0
        %1936 = vmatprep.subr.mxu0 0.0
        %1937 = vmatpush1.msra.mxu0 0.0
        %1938 = vmatprep.subr.mxu0 0.0
        %1939 = vmatpush1.msra.mxu0 0.0
        %1940 = vmatprep.subr.mxu0 0.0
        %1941 = vmatpush1.msra.mxu0 0.0
        %1942 = vmatprep.subr.mxu0 0.0
        %1943 = vmatpush1.msra.mxu0 0.0
        %1944 = vmatprep.mubr.f32.mxu0 0.0
        %1945 = vmatmul.mubr.f32.gmra.mrb[0].mxu0 %v1874
        %v1946 = vpop.f32.mrb[0].mxu0
        %v1947 = vadd.f32 0.0, %v1946
        %v1948 = vpop.f32.mrb[0].mxu0
        %v1949 = vadd.f32 0.0, %v1948
        %1950 = vdwg.mxu0
        %v1951 = vadd.f32 %v1854, %v1947
        %v1952 = vadd.f32 %v1855, %v1949
        %v1953 = vld [vmem:[#allocation2] sm:$0xff]
        %v1954 = vld [vmem:[#allocation2 + $0x8] sm:$0xf]
        %s1955 = scalar_lea.vmem [#allocation6], 28
        %v1956 = vld [vmem:[%s1955] sm:$0xf]
        %v1959 = vcombine.high %v1953, %v1953
        %1960 = vrot.lane.b32.xlu0 %v1953, 95
        %v1961 = vpop.permute.xlu0 %1960
        %1962 = vrot.lane.b32.xlu0 %v1959, 95
        %v1963 = vpop.permute.xlu0 %1962
        %1964 = vrot.lane.b32.xlu0 %v1954, 95
        %v1965 = vpop.permute.xlu0 %1964
        %v1966 = vsel %vm1078, %v1961, %v1963
        %v1967 = vsel %vm1078, %v1963, %v1965
        %v1969 = vsel %vm386, %v1956, 0
        %v1971 = vsel %vm390, %v1966, 0
        %v1973 = vsel %vm390, %v1967, 0
        %1975 = vmatprep.subr.mxu0 %v1973
        %1976 = vmatpush1.msra.mxu0 %v1971
        %1977 = vmatprep.subr.mxu0 0.0
        %1978 = vmatpush1.msra.mxu0 0.0
        %1979 = vmatprep.subr.mxu0 0.0
        %1980 = vmatpush1.msra.mxu0 0.0
        %1981 = vmatprep.subr.mxu0 0.0
        %1982 = vmatpush1.msra.mxu0 0.0
        %1983 = vmatprep.subr.mxu0 0.0
        %1984 = vmatpush1.msra.mxu0 0.0
        %1985 = vmatprep.subr.mxu0 0.0
        %1986 = vmatpush1.msra.mxu0 0.0
        %1987 = vmatprep.subr.mxu0 0.0
        %1988 = vmatpush1.msra.mxu0 0.0
        %1989 = vmatprep.subr.mxu0 0.0
        %1990 = vmatpush1.msra.mxu0 0.0
        %1991 = vmatprep.subr.mxu0 0.0
        %1992 = vmatpush1.msra.mxu0 0.0
        %1993 = vmatprep.subr.mxu0 0.0
        %1994 = vmatpush1.msra.mxu0 0.0
        %1995 = vmatprep.subr.mxu0 0.0
        %1996 = vmatpush1.msra.mxu0 0.0
        %1997 = vmatprep.subr.mxu0 0.0
        %1998 = vmatpush1.msra.mxu0 0.0
        %1999 = vmatprep.subr.mxu0 0.0
        %2000 = vmatpush1.msra.mxu0 0.0
        %2001 = vmatprep.subr.mxu0 0.0
        %2002 = vmatpush1.msra.mxu0 0.0
        %2003 = vmatprep.subr.mxu0 0.0
        %2004 = vmatpush1.msra.mxu0 0.0
        %2005 = vmatprep.subr.mxu0 0.0
        %2006 = vmatpush1.msra.mxu0 0.0
        %2007 = vmatprep.subr.mxu0 0.0
        %2008 = vmatpush1.msra.mxu0 0.0
        %2009 = vmatprep.subr.mxu0 0.0
        %2010 = vmatpush1.msra.mxu0 0.0
        %2011 = vmatprep.subr.mxu0 0.0
        %2012 = vmatpush1.msra.mxu0 0.0
        %2013 = vmatprep.subr.mxu0 0.0
        %2014 = vmatpush1.msra.mxu0 0.0
        %2015 = vmatprep.subr.mxu0 0.0
        %2016 = vmatpush1.msra.mxu0 0.0
        %2017 = vmatprep.subr.mxu0 0.0
        %2018 = vmatpush1.msra.mxu0 0.0
        %2019 = vmatprep.subr.mxu0 0.0
        %2020 = vmatpush1.msra.mxu0 0.0
        %2021 = vmatprep.subr.mxu0 0.0
        %2022 = vmatpush1.msra.mxu0 0.0
        %2023 = vmatprep.subr.mxu0 0.0
        %2024 = vmatpush1.msra.mxu0 0.0
        %2025 = vmatprep.subr.mxu0 0.0
        %2026 = vmatpush1.msra.mxu0 0.0
        %2027 = vmatprep.subr.mxu0 0.0
        %2028 = vmatpush1.msra.mxu0 0.0
        %2029 = vmatprep.subr.mxu0 0.0
        %2030 = vmatpush1.msra.mxu0 0.0
        %2031 = vmatprep.subr.mxu0 0.0
        %2032 = vmatpush1.msra.mxu0 0.0
        %2033 = vmatprep.subr.mxu0 0.0
        %2034 = vmatpush1.msra.mxu0 0.0
        %2035 = vmatprep.subr.mxu0 0.0
        %2036 = vmatpush1.msra.mxu0 0.0
        %2037 = vmatprep.subr.mxu0 0.0
        %2038 = vmatpush1.msra.mxu0 0.0
        %2039 = vmatprep.mubr.f32.mxu0 0.0
        %2040 = vmatmul.mubr.f32.gmra.mrb[0].mxu0 %v1969
        %v2041 = vpop.f32.mrb[0].mxu0
        %v2042 = vadd.f32 0.0, %v2041
        %v2043 = vpop.f32.mrb[0].mxu0
        %v2044 = vadd.f32 0.0, %v2043
        %2045 = vdwg.mxu0
        %v2046 = vadd.f32 %v1951, %v2042
        %v2047 = vadd.f32 %v1952, %v2044
        %v2048 = vld [vmem:[#allocation2] sm:$0xff]
        %v2049 = vld [vmem:[#allocation2 + $0x8] sm:$0xf]
        %v2050 = vmul.f32 %v2048, %v1167
        %v2051 = vmul.f32 %v2049, %v1165
        %s2052 = scalar_lea.vmem [#allocation6], 32
        %v2053 = vld [vmem:[%s2052] sm:$0xf]
        %v2056 = vcombine.high %v2050, %v2050
        %2057 = vrot.lane.b32.xlu0 %v2050, 94
        %v2058 = vpop.permute.xlu0 %2057
        %2059 = vrot.lane.b32.xlu0 %v2056, 94
        %v2060 = vpop.permute.xlu0 %2059
        %2061 = vrot.lane.b32.xlu0 %v2051, 94
        %v2062 = vpop.permute.xlu0 %2061
        %v2063 = vsel %vm1183, %v2058, %v2060
        %v2064 = vsel %vm1183, %v2060, %v2062
        %v2066 = vsel %vm386, %v2053, 0
        %v2068 = vsel %vm390, %v2063, 0
        %v2070 = vsel %vm390, %v2064, 0
        %2072 = vmatprep.subr.mxu0 %v2070
        %2073 = vmatpush1.msra.mxu0 %v2068
        %2074 = vmatprep.subr.mxu0 0.0
        %2075 = vmatpush1.msra.mxu0 0.0
        %2076 = vmatprep.subr.mxu0 0.0
        %2077 = vmatpush1.msra.mxu0 0.0
        %2078 = vmatprep.subr.mxu0 0.0
        %2079 = vmatpush1.msra.mxu0 0.0
        %2080 = vmatprep.subr.mxu0 0.0
        %2081 = vmatpush1.msra.mxu0 0.0
        %2082 = vmatprep.subr.mxu0 0.0
        %2083 = vmatpush1.msra.mxu0 0.0
        %2084 = vmatprep.subr.mxu0 0.0
        %2085 = vmatpush1.msra.mxu0 0.0
        %2086 = vmatprep.subr.mxu0 0.0
        %2087 = vmatpush1.msra.mxu0 0.0
        %2088 = vmatprep.subr.mxu0 0.0
        %2089 = vmatpush1.msra.mxu0 0.0
        %2090 = vmatprep.subr.mxu0 0.0
        %2091 = vmatpush1.msra.mxu0 0.0
        %2092 = vmatprep.subr.mxu0 0.0
        %2093 = vmatpush1.msra.mxu0 0.0
        %2094 = vmatprep.subr.mxu0 0.0
        %2095 = vmatpush1.msra.mxu0 0.0
        %2096 = vmatprep.subr.mxu0 0.0
        %2097 = vmatpush1.msra.mxu0 0.0
        %2098 = vmatprep.subr.mxu0 0.0
        %2099 = vmatpush1.msra.mxu0 0.0
        %2100 = vmatprep.subr.mxu0 0.0
        %2101 = vmatpush1.msra.mxu0 0.0
        %2102 = vmatprep.subr.mxu0 0.0
        %2103 = vmatpush1.msra.mxu0 0.0
        %2104 = vmatprep.subr.mxu0 0.0
        %2105 = vmatpush1.msra.mxu0 0.0
        %2106 = vmatprep.subr.mxu0 0.0
        %2107 = vmatpush1.msra.mxu0 0.0
        %2108 = vmatprep.subr.mxu0 0.0
        %2109 = vmatpush1.msra.mxu0 0.0
        %2110 = vmatprep.subr.mxu0 0.0
        %2111 = vmatpush1.msra.mxu0 0.0
        %2112 = vmatprep.subr.mxu0 0.0
        %2113 = vmatpush1.msra.mxu0 0.0
        %2114 = vmatprep.subr.mxu0 0.0
        %2115 = vmatpush1.msra.mxu0 0.0
        %2116 = vmatprep.subr.mxu0 0.0
        %2117 = vmatpush1.msra.mxu0 0.0
        %2118 = vmatprep.subr.mxu0 0.0
        %2119 = vmatpush1.msra.mxu0 0.0
        %2120 = vmatprep.subr.mxu0 0.0
        %2121 = vmatpush1.msra.mxu0 0.0
        %2122 = vmatprep.subr.mxu0 0.0
        %2123 = vmatpush1.msra.mxu0 0.0
        %2124 = vmatprep.subr.mxu0 0.0
        %2125 = vmatpush1.msra.mxu0 0.0
        %2126 = vmatprep.subr.mxu0 0.0
        %2127 = vmatpush1.msra.mxu0 0.0
        %2128 = vmatprep.subr.mxu0 0.0
        %2129 = vmatpush1.msra.mxu0 0.0
        %2130 = vmatprep.subr.mxu0 0.0
        %2131 = vmatpush1.msra.mxu0 0.0
        %2132 = vmatprep.subr.mxu0 0.0
        %2133 = vmatpush1.msra.mxu0 0.0
        %2134 = vmatprep.subr.mxu0 0.0
        %2135 = vmatpush1.msra.mxu0 0.0
        %2136 = vmatprep.mubr.f32.mxu0 0.0
        %2137 = vmatmul.mubr.f32.gmra.mrb[0].mxu0 %v2066
        %v2138 = vpop.f32.mrb[0].mxu0
        %v2139 = vadd.f32 0.0, %v2138
        %v2140 = vpop.f32.mrb[0].mxu0
        %v2141 = vadd.f32 0.0, %v2140
        %2142 = vdwg.mxu0
        %v2143 = vadd.f32 %v2046, %v2139
        %v2144 = vadd.f32 %v2047, %v2141
        %v2145 = vld [vmem:[%s5] sm:$0xf]
        %2147 = vset.pattern.permute.xlu0 0
        %2148 = vperm.xlu0 %2147, %v2145
        %v2149 = vpop.permute.xlu0 %2148
        %v2151 = vmul.f32 %v2143, %v2149
        %v2152 = vmul.f32 %v2144, %v2149
        %v2153 = vld [vmem:[%s6] sm:$0xf]
        %2155 = vset.pattern.permute.xlu0 0
        %2156 = vperm.xlu0 %2155, %v2153
        %v2157 = vpop.permute.xlu0 %2156
        %v2159 = vadd.f32 %v2151, %v2157
        %v2160 = vadd.f32 %v2152, %v2157
        %v2161 = vld [vmem:[%s306] sm:$0xff]
        %v2163 = vcombine.high %v2161, %v2161
        %v2165 = vadd.f32 %v2159, %v2161
        %v2166 = vadd.f32 %v2160, %v2163
        %v2167 = vmax.f32 %v2165, 0.0
        %v2168 = vmax.f32 %v2166, 0.0
        %v2171 = vcombine.low %v2167, %v2168
        %2173 = vst [vmem:[%s301] sm:$0xff] %v2171
        %s2174 = sand.u32 %s183, 1
        %s2175 = scalar_lea.sflag [#allocation5], %s2174
        %s2176 = sand.u32 %s183, 1
        %s2177 = smul.addr %s2176, 8
        %s2178 = scalar_lea.vmem [#allocation8], %s2177
        // Predicated region
        $region57: #{tpu_custom_call.1} parent=47 // pred_check
          %p2179 = pneg %p193
        $region58: #{tpu_custom_call.1} parent=47 // pred_check_branch
          %2181 = sbr.rel (%p2179) target = $region60
        $region59: #{tpu_custom_call.1} parent=47 // pred_region
          %s2183 = ssub.s32 128, 128
          %2184 = vsyncadd %s2175, %s2183
          %s2185 = smul.addr %s23, 2
          %s2186 = smul.addr %s2185, 64
          %s2187 = scalar_lea.hbm %s7, %s2186
          %s2189 = sshll.u32 %s2178, 4
          %s2190 = int_to_ptr.vmem [resolvable:$true] %s2189
          %2192 = dma.vmem_to_hbm [thread:$0]  %s2190, 128, %s2187, %s2175
        $region60: #{tpu_custom_call.1} parent=47 // pred_fallthru
          _
      $region48: #{tpu_custom_call.1} parent=5 // pred_fallthru
        _
      %p2193 = scmp.le.s32.totalorder 2, %s18
      // Predicated region
      $region61: #{tpu_custom_call.1} parent=5 // pred_check
        %p2194 = pneg %p2193
      $region62: #{tpu_custom_call.1} parent=5 // pred_check_branch
        %2196 = sbr.rel (%p2194) target = $region64
      $region63: #{tpu_custom_call.1} parent=5 // pred_region
        %s2197 = ssub.s32 %s18, 2
        // Predicated region
        $region65: #{tpu_custom_call.1} parent=63 // pred_check
          %p2198 = pneg %p199
        $region66: #{tpu_custom_call.1} parent=63 // pred_check_branch
          %2200 = sbr.rel (%p2198) target = $region68
        $region67: #{tpu_custom_call.1} parent=63 // pred_region
          %s2201 = sand.u32 %s184, 1
          %s2202 = scalar_lea.sflag [#allocation5], %s2201
          %s2203 = sand.u32 %s184, 1
          %s2204 = smul.addr %s2203, 8
          %s2205 = scalar_lea.vmem [#allocation8], %s2204
          %2206 = dma.done %s2202, 128
        $region68: #{tpu_custom_call.1} parent=63 // pred_fallthru
          _
      $region64: #{tpu_custom_call.1} parent=5 // pred_fallthru
        _
    $region6: #{tpu_custom_call.1} parent=1 // loop_footer
      %s22 = sadd.s32 1, %s18
    $region7: #{tpu_custom_call.1} parent=1 // loop_footer_branch
      %17 = sbr.rel target = $region3
    $region8: #{tpu_custom_call.1} parent=1 // loop_exit
      _
    %2207 = vsyncpa [#allocation4], 1
    %s2208 = scalar_lea.sflag [#allocation4], 1
    %2209 = vsyncpa %s2208, 1
    %2210 = vsyncpa [#allocation7], 1
    %2211 = vsyncpa [#allocation5], 1
    %s2212 = scalar_lea.sflag [#allocation5], 1
    %2213 = vsyncpa %s2212, 1

</llo_original>
